<compile_context>
chip_gen: v6e
topology: v6e:2x2x1
jax: 0.10.0
libtpu: 0.0.40
codegen_flags: <defaults>
</compile_context>

<pallas_src>
import functools

import jax
import jax.numpy as jnp
from jax import lax
from jax.experimental import pallas as pl
from jax.experimental.pallas import tpu as pltpu

INPUT_SIZE = 7
HIDDEN_SIZE = 100
OUTPUT_SIZE = 1
LN_EPS = 1e-5
LANE = 128
SUBLANE = 8

# New lane-block order holds PyTorch gates (i, f, o, g): sigmoid gates are the
# first three contiguous blocks, tanh gate is the last block.
GATE_SRC_ORDER = (0, 1, 3, 2)  # block p <- PyTorch gate GATE_SRC_ORDER[p]


def _round_up(n, m):
    return ((n + m - 1) // m) * m


def _lstm_model_kernel(x_ref, wih_ref, whh_ref, bias_ref, gamma_ref, beta_ref,
                       fcw_ref, fcb_ref, out_ref, *, Bp, T, H):
    # x_ref    : (T*Bp, I)  time-major flattened input (row t*Bp + b), f32
    # wih_ref  : (I, 4*Hp)  W_ih^T, gate block p in lanes [p*Hp, p*Hp + H), f32
    # whh_ref  : (Hp, 4*Hp) W_hh^T, same gate packing, zero-padded rows, f32
    # bias_ref : (1, 4*Hp)  b_ih + b_hh, gate-packed, f32
    # gamma_ref: (1, Hp)    LayerNorm weight (zero-padded), f32
    # beta_ref : (1, Hp)    LayerNorm bias   (zero-padded), f32
    # fcw_ref  : (1, Hp)    fc.weight row    (zero-padded), f32
    # fcb_ref  : (1,)       fc.bias scalar, SMEM
    # out_ref  : (Bp, 128)  lane-dense output block (result broadcast across lanes)
    Hp = whh_ref.shape[0]

    # ---- Hoisted, non-recurrent input projection: one MXU call --------------
    xw = jnp.dot(x_ref[...], wih_ref[...],
                 preferred_element_type=jnp.float32) + bias_ref[...]   # (T*Bp, 4Hp)

    h = jnp.zeros((Bp, Hp), jnp.float32)
    c = jnp.zeros((Bp, Hp), jnp.float32)

    # ---- Fully unrolled recurrence (T small & static) ------------------------
    for t in range(T):
        # Time-major layout => one static, contiguous, sublane-aligned slice.
        gx = xw[t * Bp:(t + 1) * Bp, :]                                 # (Bp, 4Hp)

        # Recurrent matmul; W_hh re-read from VMEM each step (not held in vregs).
        gates = gx + jnp.dot(h, whh_ref[...],
                             preferred_element_type=jnp.float32)        # (Bp, 4Hp)

        # Gate blocks are (i, f, o, g): one sigmoid over 3 blocks + one tanh.
        sig = jax.nn.sigmoid(gates[:, 0:3 * Hp])                        # (Bp, 3Hp)
        g_g = jnp.tanh(gates[:, 3 * Hp:4 * Hp])                         # (Bp, Hp)
        i_g = sig[:, 0 * Hp:1 * Hp]
        f_g = sig[:, 1 * Hp:2 * Hp]
        o_g = sig[:, 2 * Hp:3 * Hp]

        c = f_g * c + i_g * g_g
        h = o_g * jnp.tanh(c)
        # Padded lanes: gates==0 -> sigmoid=0.5, tanh=0 -> c_pad, h_pad stay 0.

    # ---- LayerNorm over the real H lanes only (padded lanes masked) ---------
    lane_idx = lax.broadcasted_iota(jnp.int32, (Bp, Hp), 1)
    valid = lane_idx < H
    mean = jnp.sum(h, axis=-1, keepdims=True) / H            # padded h lanes are 0
    cent = jnp.where(valid, h - mean, 0.0)
    var = jnp.sum(cent * cent, axis=-1, keepdims=True) / H
    h_norm = cent * lax.rsqrt(var + LN_EPS) * gamma_ref[...] + beta_ref[...]

    # Dropout(p=0.2): identity in eval/inference mode.
    # TODO(synk): training-mode dropout (RNG mask + 1/(1-p) scaling) not implemented.

    # ---- fc (H -> 1): VPU multiply + lane reduction, lane-dense store --------
    val = jnp.sum(h_norm * fcw_ref[...], axis=-1, keepdims=True) + fcb_ref[0]  # (Bp, 1)
    out_ref[...] = jnp.broadcast_to(val, out_ref.shape)


def _pack_gates(w_t, H, Hp):
    """(rows, 4*H) PyTorch gate order -> (rows, 4*Hp) with block order (i,f,o,g)."""
    rows = w_t.shape[0]
    out = jnp.zeros((rows, 4 * Hp), jnp.float32)
    for new_g, src_g in enumerate(GATE_SRC_ORDER):
        out = out.at[:, new_g * Hp:new_g * Hp + H].set(
            w_t[:, src_g * H:(src_g + 1) * H])
    return out


def init_params(key, input_size=INPUT_SIZE, hidden_size=HIDDEN_SIZE,
                output_size=OUTPUT_SIZE):
    """Deterministic parameter init mirroring the PyTorch shapes."""
    k = 1.0 / jnp.sqrt(hidden_size)
    keys = jax.random.split(key, 6)
    return {
        "w_ih": jax.random.uniform(keys[0], (4 * hidden_size, input_size),
                                   jnp.float32, -k, k),
        "w_hh": jax.random.uniform(keys[1], (4 * hidden_size, hidden_size),
                                   jnp.float32, -k, k),
        "b_ih": jax.random.uniform(keys[2], (4 * hidden_size,),
                                   jnp.float32, -k, k),
        "b_hh": jax.random.uniform(keys[3], (4 * hidden_size,),
                                   jnp.float32, -k, k),
        "ln_gamma": jnp.ones((hidden_size,), jnp.float32),
        "ln_beta": jnp.zeros((hidden_size,), jnp.float32),
        "fc_w": jax.random.uniform(keys[4], (output_size, hidden_size),
                                   jnp.float32, -k, k),
        "fc_b": jax.random.uniform(keys[5], (output_size,),
                                   jnp.float32, -k, k),
    }


def lstm_model_forward(x, params):
    """x: (B, T, I) float32, batch_first — matches the PyTorch module (eval mode)."""
    B, T, I = x.shape
    H = params["w_hh"].shape[1]
    O = params["fc_w"].shape[0]
    assert O == 1, "module spec has output_size == 1"
    Hp = _round_up(H, LANE)
    Bp = _round_up(B, SUBLANE)
    OUT_PAD = LANE

    # --- weight / bias packing into lane-aligned padded layouts (f32) --------
    wih_p = _pack_gates(params["w_ih"].T.astype(jnp.float32), H, Hp)      # (I, 4Hp)
    whh_p = jnp.zeros((Hp, 4 * Hp), jnp.float32)
    whh_p = whh_p.at[:H, :].set(
        _pack_gates(params["w_hh"].T.astype(jnp.float32), H, Hp))         # (Hp, 4Hp)
    bias_p = _pack_gates(
        (params["b_ih"] + params["b_hh"]).reshape(1, 4 * H).astype(jnp.float32),
        H, Hp)                                                            # (1, 4Hp)
    gamma_p = jnp.zeros((1, Hp), jnp.float32).at[:, :H].set(params["ln_gamma"][None, :])
    beta_p = jnp.zeros((1, Hp), jnp.float32).at[:, :H].set(params["ln_beta"][None, :])
    fcw_p = jnp.zeros((1, Hp), jnp.float32).at[:, :H].set(params["fc_w"].astype(jnp.float32))
    fcb = params["fc_b"].astype(jnp.float32).reshape((1,))                # SMEM scalar

    # --- batch pad to a full sublane group, then time-major flatten ----------
    x_p = jnp.zeros((Bp, T, I), jnp.float32).at[:B].set(x.astype(jnp.float32))
    x2 = x_p.transpose(1, 0, 2).reshape(T * Bp, I)                        # (T*Bp, I)

    kernel = functools.partial(_lstm_model_kernel, Bp=Bp, T=T, H=H)
    vmem = pl.BlockSpec(memory_space=pltpu.MemorySpace.VMEM)
    smem = pl.BlockSpec(memory_space=pltpu.MemorySpace.SMEM)

    out_pad = pl.pallas_call(
        kernel,
        out_shape=jax.ShapeDtypeStruct((Bp, OUT_PAD), jnp.float32),
        in_specs=[vmem, vmem, vmem, vmem, vmem, vmem, vmem, smem],
        out_specs=vmem,
    )(x2, wih_p, whh_p, bias_p, gamma_p, beta_p, fcw_p, fcb)

    return out_pad[:B, :O]


def reference_forward(x, params):
    """Pure-JAX reference of the PyTorch forward (eval mode)."""
    B, T, I = x.shape
    H = params["w_hh"].shape[1]
    h = jnp.zeros((B, H), jnp.float32)
    c = jnp.zeros((B, H), jnp.float32)
    for t in range(T):
        gates = (x[:, t, :] @ params["w_ih"].T + params["b_ih"]
                 + h @ params["w_hh"].T + params["b_hh"])
        i_g = jax.nn.sigmoid(gates[:, 0 * H:1 * H])
        f_g = jax.nn.sigmoid(gates[:, 1 * H:2 * H])
        g_g = jnp.tanh(gates[:, 2 * H:3 * H])
        o_g = jax.nn.sigmoid(gates[:, 3 * H:4 * H])
        c = f_g * c + i_g * g_g
        h = o_g * jnp.tanh(c)
    mean = jnp.mean(h, axis=-1, keepdims=True)
    var = jnp.mean((h - mean) ** 2, axis=-1, keepdims=True)
    h = (h - mean) / jnp.sqrt(var + LN_EPS)
    h = h * params["ln_gamma"] + params["ln_beta"]
    return h @ params["fc_w"].T + params["fc_b"]


if __name__ == "__main__":
    key = jax.random.PRNGKey(0)
    k_param, k_x = jax.random.split(key)

    B, T = 2, 8
    params = init_params(k_param)
    x = jax.random.normal(k_x, (B, T, INPUT_SIZE), jnp.float32)

    ref = reference_forward(x, params)

    out = jax.block_until_ready(lstm_model_forward(x, params))
    assert out.shape == (B, OUTPUT_SIZE)
    assert jnp.allclose(out, ref, rtol=1e-3, atol=1e-3), (out, ref)

    print("KERNEL_OK")
</pallas_src>

<mosaic_0001>
module attributes {stable_mosaic.version = 11 : i64} {
  func.func @_lstm_model_kernel(%arg0: memref<64x7xf32, #tpu.memory_space<vmem>>, %arg1: memref<7x512xf32, #tpu.memory_space<vmem>>, %arg2: memref<128x512xf32, #tpu.memory_space<vmem>>, %arg3: memref<1x512xf32, #tpu.memory_space<vmem>>, %arg4: memref<1x128xf32, #tpu.memory_space<vmem>>, %arg5: memref<1x128xf32, #tpu.memory_space<vmem>>, %arg6: memref<1x128xf32, #tpu.memory_space<vmem>>, %arg7: memref<1xf32, #tpu.memory_space<smem>>, %arg8: memref<8x128xf32, #tpu.memory_space<vmem>>) attributes {dimension_semantics = [], scalar_prefetch = 0 : i64, scratch_operands = 0 : i64, tpu.core_type = #tpu.core_type<tc>} {
    %c0 = arith.constant 0 : index
    %c0_0 = arith.constant 0 : index
    %0 = vector.load %arg0[%c0, %c0_0] : memref<64x7xf32, #tpu.memory_space<vmem>>, vector<64x7xf32>
    %c0_1 = arith.constant 0 : index
    %c0_2 = arith.constant 0 : index
    %1 = vector.load %arg1[%c0_1, %c0_2] : memref<7x512xf32, #tpu.memory_space<vmem>>, vector<7x512xf32>
    %cst = arith.constant dense<0.000000e+00> : vector<64x512xf32>
    %2 = tpu.matmul %0, %1, %cst {dimension_numbers = #tpu.dot_dimension_numbers<[1], [0], [0], [1], [0, 0, 1, 1], [], []>} : vector<64x7xf32>, vector<7x512xf32>, vector<64x512xf32> -> vector<64x512xf32>
    %c0_3 = arith.constant 0 : index
    %c0_4 = arith.constant 0 : index
    %3 = vector.load %arg3[%c0_3, %c0_4] : memref<1x512xf32, #tpu.memory_space<vmem>>, vector<1x512xf32>
    %4 = vector.broadcast %3 : vector<1x512xf32> to vector<64x512xf32>
    %5 = arith.addf %2, %4 : vector<64x512xf32>
    %cst_5 = arith.constant 0.000000e+00 : f32
    %6 = vector.broadcast %cst_5 : f32 to vector<8x128xf32>
    %cst_6 = arith.constant 0.000000e+00 : f32
    %7 = vector.broadcast %cst_6 : f32 to vector<8x128xf32>
    %8 = vector.extract_strided_slice %5 {offsets = [0, 0], sizes = [8, 512], strides = [1, 1]} : vector<64x512xf32> to vector<8x512xf32>
    %c0_7 = arith.constant 0 : index
    %c0_8 = arith.constant 0 : index
    %9 = vector.load %arg2[%c0_7, %c0_8] : memref<128x512xf32, #tpu.memory_space<vmem>>, vector<128x512xf32>
    %cst_9 = arith.constant dense<0.000000e+00> : vector<8x512xf32>
    %10 = tpu.matmul %6, %9, %cst_9 {dimension_numbers = #tpu.dot_dimension_numbers<[1], [0], [0], [1], [0, 0, 1, 1], [], []>} : vector<8x128xf32>, vector<128x512xf32>, vector<8x512xf32> -> vector<8x512xf32>
    %11 = arith.addf %8, %10 : vector<8x512xf32>
    %12 = vector.extract_strided_slice %11 {offsets = [0, 0], sizes = [8, 384], strides = [1, 1]} : vector<8x512xf32> to vector<8x384xf32>
    %13 = arith.negf %12 : vector<8x384xf32>
    %14 = math.exp %13 : vector<8x384xf32>
    %cst_10 = arith.constant 1.000000e+00 : f32
    %15 = vector.broadcast %cst_10 : f32 to vector<8x384xf32>
    %16 = arith.addf %15, %14 : vector<8x384xf32>
    %17 = arith.divf %15, %16 : vector<8x384xf32>
    %18 = vector.extract_strided_slice %11 {offsets = [0, 384], sizes = [8, 128], strides = [1, 1]} : vector<8x512xf32> to vector<8x128xf32>
    %19 = math.tanh %18 : vector<8x128xf32>
    %20 = vector.extract_strided_slice %17 {offsets = [0, 0], sizes = [8, 128], strides = [1, 1]} : vector<8x384xf32> to vector<8x128xf32>
    %21 = vector.extract_strided_slice %17 {offsets = [0, 128], sizes = [8, 128], strides = [1, 1]} : vector<8x384xf32> to vector<8x128xf32>
    %22 = vector.extract_strided_slice %17 {offsets = [0, 256], sizes = [8, 128], strides = [1, 1]} : vector<8x384xf32> to vector<8x128xf32>
    %23 = arith.mulf %21, %7 : vector<8x128xf32>
    %24 = arith.mulf %20, %19 : vector<8x128xf32>
    %25 = arith.addf %23, %24 : vector<8x128xf32>
    %26 = math.tanh %25 : vector<8x128xf32>
    %27 = arith.mulf %22, %26 : vector<8x128xf32>
    %28 = vector.extract_strided_slice %5 {offsets = [8, 0], sizes = [8, 512], strides = [1, 1]} : vector<64x512xf32> to vector<8x512xf32>
    %c0_11 = arith.constant 0 : index
    %c0_12 = arith.constant 0 : index
    %29 = vector.load %arg2[%c0_11, %c0_12] : memref<128x512xf32, #tpu.memory_space<vmem>>, vector<128x512xf32>
    %cst_13 = arith.constant dense<0.000000e+00> : vector<8x512xf32>
    %30 = tpu.matmul %27, %29, %cst_13 {dimension_numbers = #tpu.dot_dimension_numbers<[1], [0], [0], [1], [0, 0, 1, 1], [], []>} : vector<8x128xf32>, vector<128x512xf32>, vector<8x512xf32> -> vector<8x512xf32>
    %31 = arith.addf %28, %30 : vector<8x512xf32>
    %32 = vector.extract_strided_slice %31 {offsets = [0, 0], sizes = [8, 384], strides = [1, 1]} : vector<8x512xf32> to vector<8x384xf32>
    %33 = arith.negf %32 : vector<8x384xf32>
    %34 = math.exp %33 : vector<8x384xf32>
    %cst_14 = arith.constant 1.000000e+00 : f32
    %35 = vector.broadcast %cst_14 : f32 to vector<8x384xf32>
    %36 = arith.addf %35, %34 : vector<8x384xf32>
    %37 = arith.divf %35, %36 : vector<8x384xf32>
    %38 = vector.extract_strided_slice %31 {offsets = [0, 384], sizes = [8, 128], strides = [1, 1]} : vector<8x512xf32> to vector<8x128xf32>
    %39 = math.tanh %38 : vector<8x128xf32>
    %40 = vector.extract_strided_slice %37 {offsets = [0, 0], sizes = [8, 128], strides = [1, 1]} : vector<8x384xf32> to vector<8x128xf32>
    %41 = vector.extract_strided_slice %37 {offsets = [0, 128], sizes = [8, 128], strides = [1, 1]} : vector<8x384xf32> to vector<8x128xf32>
    %42 = vector.extract_strided_slice %37 {offsets = [0, 256], sizes = [8, 128], strides = [1, 1]} : vector<8x384xf32> to vector<8x128xf32>
    %43 = arith.mulf %41, %25 : vector<8x128xf32>
    %44 = arith.mulf %40, %39 : vector<8x128xf32>
    %45 = arith.addf %43, %44 : vector<8x128xf32>
    %46 = math.tanh %45 : vector<8x128xf32>
    %47 = arith.mulf %42, %46 : vector<8x128xf32>
    %48 = vector.extract_strided_slice %5 {offsets = [16, 0], sizes = [8, 512], strides = [1, 1]} : vector<64x512xf32> to vector<8x512xf32>
    %c0_15 = arith.constant 0 : index
    %c0_16 = arith.constant 0 : index
    %49 = vector.load %arg2[%c0_15, %c0_16] : memref<128x512xf32, #tpu.memory_space<vmem>>, vector<128x512xf32>
    %cst_17 = arith.constant dense<0.000000e+00> : vector<8x512xf32>
    %50 = tpu.matmul %47, %49, %cst_17 {dimension_numbers = #tpu.dot_dimension_numbers<[1], [0], [0], [1], [0, 0, 1, 1], [], []>} : vector<8x128xf32>, vector<128x512xf32>, vector<8x512xf32> -> vector<8x512xf32>
    %51 = arith.addf %48, %50 : vector<8x512xf32>
    %52 = vector.extract_strided_slice %51 {offsets = [0, 0], sizes = [8, 384], strides = [1, 1]} : vector<8x512xf32> to vector<8x384xf32>
    %53 = arith.negf %52 : vector<8x384xf32>
    %54 = math.exp %53 : vector<8x384xf32>
    %cst_18 = arith.constant 1.000000e+00 : f32
    %55 = vector.broadcast %cst_18 : f32 to vector<8x384xf32>
    %56 = arith.addf %55, %54 : vector<8x384xf32>
    %57 = arith.divf %55, %56 : vector<8x384xf32>
    %58 = vector.extract_strided_slice %51 {offsets = [0, 384], sizes = [8, 128], strides = [1, 1]} : vector<8x512xf32> to vector<8x128xf32>
    %59 = math.tanh %58 : vector<8x128xf32>
    %60 = vector.extract_strided_slice %57 {offsets = [0, 0], sizes = [8, 128], strides = [1, 1]} : vector<8x384xf32> to vector<8x128xf32>
    %61 = vector.extract_strided_slice %57 {offsets = [0, 128], sizes = [8, 128], strides = [1, 1]} : vector<8x384xf32> to vector<8x128xf32>
    %62 = vector.extract_strided_slice %57 {offsets = [0, 256], sizes = [8, 128], strides = [1, 1]} : vector<8x384xf32> to vector<8x128xf32>
    %63 = arith.mulf %61, %45 : vector<8x128xf32>
    %64 = arith.mulf %60, %59 : vector<8x128xf32>
    %65 = arith.addf %63, %64 : vector<8x128xf32>
    %66 = math.tanh %65 : vector<8x128xf32>
    %67 = arith.mulf %62, %66 : vector<8x128xf32>
    %68 = vector.extract_strided_slice %5 {offsets = [24, 0], sizes = [8, 512], strides = [1, 1]} : vector<64x512xf32> to vector<8x512xf32>
    %c0_19 = arith.constant 0 : index
    %c0_20 = arith.constant 0 : index
    %69 = vector.load %arg2[%c0_19, %c0_20] : memref<128x512xf32, #tpu.memory_space<vmem>>, vector<128x512xf32>
    %cst_21 = arith.constant dense<0.000000e+00> : vector<8x512xf32>
    %70 = tpu.matmul %67, %69, %cst_21 {dimension_numbers = #tpu.dot_dimension_numbers<[1], [0], [0], [1], [0, 0, 1, 1], [], []>} : vector<8x128xf32>, vector<128x512xf32>, vector<8x512xf32> -> vector<8x512xf32>
    %71 = arith.addf %68, %70 : vector<8x512xf32>
    %72 = vector.extract_strided_slice %71 {offsets = [0, 0], sizes = [8, 384], strides = [1, 1]} : vector<8x512xf32> to vector<8x384xf32>
    %73 = arith.negf %72 : vector<8x384xf32>
    %74 = math.exp %73 : vector<8x384xf32>
    %cst_22 = arith.constant 1.000000e+00 : f32
    %75 = vector.broadcast %cst_22 : f32 to vector<8x384xf32>
    %76 = arith.addf %75, %74 : vector<8x384xf32>
    %77 = arith.divf %75, %76 : vector<8x384xf32>
    %78 = vector.extract_strided_slice %71 {offsets = [0, 384], sizes = [8, 128], strides = [1, 1]} : vector<8x512xf32> to vector<8x128xf32>
    %79 = math.tanh %78 : vector<8x128xf32>
    %80 = vector.extract_strided_slice %77 {offsets = [0, 0], sizes = [8, 128], strides = [1, 1]} : vector<8x384xf32> to vector<8x128xf32>
    %81 = vector.extract_strided_slice %77 {offsets = [0, 128], sizes = [8, 128], strides = [1, 1]} : vector<8x384xf32> to vector<8x128xf32>
    %82 = vector.extract_strided_slice %77 {offsets = [0, 256], sizes = [8, 128], strides = [1, 1]} : vector<8x384xf32> to vector<8x128xf32>
    %83 = arith.mulf %81, %65 : vector<8x128xf32>
    %84 = arith.mulf %80, %79 : vector<8x128xf32>
    %85 = arith.addf %83, %84 : vector<8x128xf32>
    %86 = math.tanh %85 : vector<8x128xf32>
    %87 = arith.mulf %82, %86 : vector<8x128xf32>
    %88 = vector.extract_strided_slice %5 {offsets = [32, 0], sizes = [8, 512], strides = [1, 1]} : vector<64x512xf32> to vector<8x512xf32>
    %c0_23 = arith.constant 0 : index
    %c0_24 = arith.constant 0 : index
    %89 = vector.load %arg2[%c0_23, %c0_24] : memref<128x512xf32, #tpu.memory_space<vmem>>, vector<128x512xf32>
    %cst_25 = arith.constant dense<0.000000e+00> : vector<8x512xf32>
    %90 = tpu.matmul %87, %89, %cst_25 {dimension_numbers = #tpu.dot_dimension_numbers<[1], [0], [0], [1], [0, 0, 1, 1], [], []>} : vector<8x128xf32>, vector<128x512xf32>, vector<8x512xf32> -> vector<8x512xf32>
    %91 = arith.addf %88, %90 : vector<8x512xf32>
    %92 = vector.extract_strided_slice %91 {offsets = [0, 0], sizes = [8, 384], strides = [1, 1]} : vector<8x512xf32> to vector<8x384xf32>
    %93 = arith.negf %92 : vector<8x384xf32>
    %94 = math.exp %93 : vector<8x384xf32>
    %cst_26 = arith.constant 1.000000e+00 : f32
    %95 = vector.broadcast %cst_26 : f32 to vector<8x384xf32>
    %96 = arith.addf %95, %94 : vector<8x384xf32>
    %97 = arith.divf %95, %96 : vector<8x384xf32>
    %98 = vector.extract_strided_slice %91 {offsets = [0, 384], sizes = [8, 128], strides = [1, 1]} : vector<8x512xf32> to vector<8x128xf32>
    %99 = math.tanh %98 : vector<8x128xf32>
    %100 = vector.extract_strided_slice %97 {offsets = [0, 0], sizes = [8, 128], strides = [1, 1]} : vector<8x384xf32> to vector<8x128xf32>
    %101 = vector.extract_strided_slice %97 {offsets = [0, 128], sizes = [8, 128], strides = [1, 1]} : vector<8x384xf32> to vector<8x128xf32>
    %102 = vector.extract_strided_slice %97 {offsets = [0, 256], sizes = [8, 128], strides = [1, 1]} : vector<8x384xf32> to vector<8x128xf32>
    %103 = arith.mulf %101, %85 : vector<8x128xf32>
    %104 = arith.mulf %100, %99 : vector<8x128xf32>
    %105 = arith.addf %103, %104 : vector<8x128xf32>
    %106 = math.tanh %105 : vector<8x128xf32>
    %107 = arith.mulf %102, %106 : vector<8x128xf32>
    %108 = vector.extract_strided_slice %5 {offsets = [40, 0], sizes = [8, 512], strides = [1, 1]} : vector<64x512xf32> to vector<8x512xf32>
    %c0_27 = arith.constant 0 : index
    %c0_28 = arith.constant 0 : index
    %109 = vector.load %arg2[%c0_27, %c0_28] : memref<128x512xf32, #tpu.memory_space<vmem>>, vector<128x512xf32>
    %cst_29 = arith.constant dense<0.000000e+00> : vector<8x512xf32>
    %110 = tpu.matmul %107, %109, %cst_29 {dimension_numbers = #tpu.dot_dimension_numbers<[1], [0], [0], [1], [0, 0, 1, 1], [], []>} : vector<8x128xf32>, vector<128x512xf32>, vector<8x512xf32> -> vector<8x512xf32>
    %111 = arith.addf %108, %110 : vector<8x512xf32>
    %112 = vector.extract_strided_slice %111 {offsets = [0, 0], sizes = [8, 384], strides = [1, 1]} : vector<8x512xf32> to vector<8x384xf32>
    %113 = arith.negf %112 : vector<8x384xf32>
    %114 = math.exp %113 : vector<8x384xf32>
    %cst_30 = arith.constant 1.000000e+00 : f32
    %115 = vector.broadcast %cst_30 : f32 to vector<8x384xf32>
    %116 = arith.addf %115, %114 : vector<8x384xf32>
    %117 = arith.divf %115, %116 : vector<8x384xf32>
    %118 = vector.extract_strided_slice %111 {offsets = [0, 384], sizes = [8, 128], strides = [1, 1]} : vector<8x512xf32> to vector<8x128xf32>
    %119 = math.tanh %118 : vector<8x128xf32>
    %120 = vector.extract_strided_slice %117 {offsets = [0, 0], sizes = [8, 128], strides = [1, 1]} : vector<8x384xf32> to vector<8x128xf32>
    %121 = vector.extract_strided_slice %117 {offsets = [0, 128], sizes = [8, 128], strides = [1, 1]} : vector<8x384xf32> to vector<8x128xf32>
    %122 = vector.extract_strided_slice %117 {offsets = [0, 256], sizes = [8, 128], strides = [1, 1]} : vector<8x384xf32> to vector<8x128xf32>
    %123 = arith.mulf %121, %105 : vector<8x128xf32>
    %124 = arith.mulf %120, %119 : vector<8x128xf32>
    %125 = arith.addf %123, %124 : vector<8x128xf32>
    %126 = math.tanh %125 : vector<8x128xf32>
    %127 = arith.mulf %122, %126 : vector<8x128xf32>
    %128 = vector.extract_strided_slice %5 {offsets = [48, 0], sizes = [8, 512], strides = [1, 1]} : vector<64x512xf32> to vector<8x512xf32>
    %c0_31 = arith.constant 0 : index
    %c0_32 = arith.constant 0 : index
    %129 = vector.load %arg2[%c0_31, %c0_32] : memref<128x512xf32, #tpu.memory_space<vmem>>, vector<128x512xf32>
    %cst_33 = arith.constant dense<0.000000e+00> : vector<8x512xf32>
    %130 = tpu.matmul %127, %129, %cst_33 {dimension_numbers = #tpu.dot_dimension_numbers<[1], [0], [0], [1], [0, 0, 1, 1], [], []>} : vector<8x128xf32>, vector<128x512xf32>, vector<8x512xf32> -> vector<8x512xf32>
    %131 = arith.addf %128, %130 : vector<8x512xf32>
    %132 = vector.extract_strided_slice %131 {offsets = [0, 0], sizes = [8, 384], strides = [1, 1]} : vector<8x512xf32> to vector<8x384xf32>
    %133 = arith.negf %132 : vector<8x384xf32>
    %134 = math.exp %133 : vector<8x384xf32>
    %cst_34 = arith.constant 1.000000e+00 : f32
    %135 = vector.broadcast %cst_34 : f32 to vector<8x384xf32>
    %136 = arith.addf %135, %134 : vector<8x384xf32>
    %137 = arith.divf %135, %136 : vector<8x384xf32>
    %138 = vector.extract_strided_slice %131 {offsets = [0, 384], sizes = [8, 128], strides = [1, 1]} : vector<8x512xf32> to vector<8x128xf32>
    %139 = math.tanh %138 : vector<8x128xf32>
    %140 = vector.extract_strided_slice %137 {offsets = [0, 0], sizes = [8, 128], strides = [1, 1]} : vector<8x384xf32> to vector<8x128xf32>
    %141 = vector.extract_strided_slice %137 {offsets = [0, 128], sizes = [8, 128], strides = [1, 1]} : vector<8x384xf32> to vector<8x128xf32>
    %142 = vector.extract_strided_slice %137 {offsets = [0, 256], sizes = [8, 128], strides = [1, 1]} : vector<8x384xf32> to vector<8x128xf32>
    %143 = arith.mulf %141, %125 : vector<8x128xf32>
    %144 = arith.mulf %140, %139 : vector<8x128xf32>
    %145 = arith.addf %143, %144 : vector<8x128xf32>
    %146 = math.tanh %145 : vector<8x128xf32>
    %147 = arith.mulf %142, %146 : vector<8x128xf32>
    %148 = vector.extract_strided_slice %5 {offsets = [56, 0], sizes = [8, 512], strides = [1, 1]} : vector<64x512xf32> to vector<8x512xf32>
    %c0_35 = arith.constant 0 : index
    %c0_36 = arith.constant 0 : index
    %149 = vector.load %arg2[%c0_35, %c0_36] : memref<128x512xf32, #tpu.memory_space<vmem>>, vector<128x512xf32>
    %cst_37 = arith.constant dense<0.000000e+00> : vector<8x512xf32>
    %150 = tpu.matmul %147, %149, %cst_37 {dimension_numbers = #tpu.dot_dimension_numbers<[1], [0], [0], [1], [0, 0, 1, 1], [], []>} : vector<8x128xf32>, vector<128x512xf32>, vector<8x512xf32> -> vector<8x512xf32>
    %151 = arith.addf %148, %150 : vector<8x512xf32>
    %152 = vector.extract_strided_slice %151 {offsets = [0, 0], sizes = [8, 384], strides = [1, 1]} : vector<8x512xf32> to vector<8x384xf32>
    %153 = arith.negf %152 : vector<8x384xf32>
    %154 = math.exp %153 : vector<8x384xf32>
    %cst_38 = arith.constant 1.000000e+00 : f32
    %155 = vector.broadcast %cst_38 : f32 to vector<8x384xf32>
    %156 = arith.addf %155, %154 : vector<8x384xf32>
    %157 = arith.divf %155, %156 : vector<8x384xf32>
    %158 = vector.extract_strided_slice %151 {offsets = [0, 384], sizes = [8, 128], strides = [1, 1]} : vector<8x512xf32> to vector<8x128xf32>
    %159 = math.tanh %158 : vector<8x128xf32>
    %160 = vector.extract_strided_slice %157 {offsets = [0, 0], sizes = [8, 128], strides = [1, 1]} : vector<8x384xf32> to vector<8x128xf32>
    %161 = vector.extract_strided_slice %157 {offsets = [0, 128], sizes = [8, 128], strides = [1, 1]} : vector<8x384xf32> to vector<8x128xf32>
    %162 = vector.extract_strided_slice %157 {offsets = [0, 256], sizes = [8, 128], strides = [1, 1]} : vector<8x384xf32> to vector<8x128xf32>
    %163 = arith.mulf %161, %145 : vector<8x128xf32>
    %164 = arith.mulf %160, %159 : vector<8x128xf32>
    %165 = arith.addf %163, %164 : vector<8x128xf32>
    %166 = math.tanh %165 : vector<8x128xf32>
    %167 = arith.mulf %162, %166 : vector<8x128xf32>
    %168 = tpu.iota {dimensions = array<i32: 1>} : vector<8x128xi32>
    %c100_i32 = arith.constant 100 : i32
    %169 = vector.broadcast %c100_i32 : i32 to vector<8x128xi32>
    %170 = arith.cmpi slt, %168, %169 : vector<8x128xi32>
    %cst_39 = arith.constant dense<0.000000e+00> : vector<8xf32>
    %171 = vector.multi_reduction <add>, %167, %cst_39 [1] : vector<8x128xf32> to vector<8xf32>
    %172 = vector.shape_cast %171 : vector<8xf32> to vector<8x1xf32>
    %cst_40 = arith.constant 1.000000e+02 : f32
    %173 = vector.broadcast %cst_40 : f32 to vector<8x1xf32>
    %174 = arith.divf %172, %173 : vector<8x1xf32>
    %175 = vector.broadcast %174 : vector<8x1xf32> to vector<8x128xf32>
    %176 = arith.subf %167, %175 : vector<8x128xf32>
    %cst_41 = arith.constant 0.000000e+00 : f32
    %177 = vector.broadcast %cst_41 : f32 to vector<8x128xf32>
    %178 = arith.select %170, %176, %177 : vector<8x128xi1>, vector<8x128xf32>
    %179 = arith.mulf %178, %178 : vector<8x128xf32>
    %cst_42 = arith.constant dense<0.000000e+00> : vector<8xf32>
    %180 = vector.multi_reduction <add>, %179, %cst_42 [1] : vector<8x128xf32> to vector<8xf32>
    %181 = vector.shape_cast %180 : vector<8xf32> to vector<8x1xf32>
    %cst_43 = arith.constant 1.000000e+02 : f32
    %182 = vector.broadcast %cst_43 : f32 to vector<8x1xf32>
    %183 = arith.divf %181, %182 : vector<8x1xf32>
    %cst_44 = arith.constant 9.99999974E-6 : f32
    %184 = vector.broadcast %cst_44 : f32 to vector<8x1xf32>
    %185 = arith.addf %183, %184 : vector<8x1xf32>
    %186 = math.rsqrt %185 : vector<8x1xf32>
    %187 = vector.broadcast %186 : vector<8x1xf32> to vector<8x128xf32>
    %188 = arith.mulf %178, %187 : vector<8x128xf32>
    %c0_45 = arith.constant 0 : index
    %c0_46 = arith.constant 0 : index
    %189 = vector.load %arg4[%c0_45, %c0_46] : memref<1x128xf32, #tpu.memory_space<vmem>>, vector<1x128xf32>
    %190 = vector.broadcast %189 : vector<1x128xf32> to vector<8x128xf32>
    %191 = arith.mulf %188, %190 : vector<8x128xf32>
    %c0_47 = arith.constant 0 : index
    %c0_48 = arith.constant 0 : index
    %192 = vector.load %arg5[%c0_47, %c0_48] : memref<1x128xf32, #tpu.memory_space<vmem>>, vector<1x128xf32>
    %193 = vector.broadcast %192 : vector<1x128xf32> to vector<8x128xf32>
    %194 = arith.addf %191, %193 : vector<8x128xf32>
    %c0_49 = arith.constant 0 : index
    %c0_50 = arith.constant 0 : index
    %195 = vector.load %arg6[%c0_49, %c0_50] : memref<1x128xf32, #tpu.memory_space<vmem>>, vector<1x128xf32>
    %196 = vector.broadcast %195 : vector<1x128xf32> to vector<8x128xf32>
    %197 = arith.mulf %194, %196 : vector<8x128xf32>
    %cst_51 = arith.constant dense<0.000000e+00> : vector<8xf32>
    %198 = vector.multi_reduction <add>, %197, %cst_51 [1] : vector<8x128xf32> to vector<8xf32>
    %199 = vector.shape_cast %198 : vector<8xf32> to vector<8x1xf32>
    %c0_52 = arith.constant 0 : index
    %200 = memref.load %arg7[%c0_52] : memref<1xf32, #tpu.memory_space<smem>>
    %201 = vector.broadcast %200 : f32 to vector<8x1xf32>
    %202 = arith.addf %199, %201 : vector<8x1xf32>
    %203 = vector.shape_cast %202 : vector<8x1xf32> to vector<8x1xf32>
    %204 = vector.broadcast %203 : vector<8x1xf32> to vector<8x128xf32>
    %c0_53 = arith.constant 0 : index
    %c0_54 = arith.constant 0 : index
    %205 = vector.load %arg8[%c0_53, %c0_54] : memref<8x128xf32, #tpu.memory_space<vmem>>, vector<8x128xf32>
    tpu.vector_store %arg8[%c0_53, %c0_54], %204 {strides = array<i32>} : memref<8x128xf32, #tpu.memory_space<vmem>>, vector<8x128xf32>,
    return
  }
}

</mosaic_0001>

<llo_original>
// kernel: tpu_custom_call.1
$region0: #{tpu_custom_call.1}
  #allocation0 [shape = 'u32[]', space=smem, size = 0x4, offset = 0x4, fixed_abs, tag = 'smem constant byte address 0x4 - core index']
  #allocation1 [shape = 'u32[144,128]{1,0:T(1,128)}', space=vmem, size = 0x12000, scoped, tag = 'internal scratch']
  #allocation2 [shape = 'f32[1]{0:T(128)S(6)}', space=smem, size = 0x200, scoped, tag = 'scoped memory for tpu_custom_call.1']
  %s0 = inlined_call_operand.vmem [shape: f32[64,7], index: 0, kind: input, shape index: {}]
  %s1 = inlined_call_operand.vmem [shape: f32[7,512], index: 1, kind: input, shape index: {}]
  %s2 = inlined_call_operand.hbm [shape: f32[128,512], index: 2, kind: input, shape index: {}]
  %s3 = inlined_call_operand.vmem [shape: f32[1,512], index: 3, kind: input, shape index: {}]
  %s4 = inlined_call_operand.vmem [shape: f32[1,128], index: 4, kind: input, shape index: {}]
  %s5 = inlined_call_operand.vmem [shape: f32[1,128], index: 5, kind: input, shape index: {}]
  %s6 = inlined_call_operand.vmem [shape: f32[1,128], index: 6, kind: input, shape index: {}]
  %s7 = inlined_call_operand.<no memory space> [shape: f32[1], index: 7, kind: input, shape index: {}]
  %s8 = inlined_call_operand.hbm [shape: f32[8,128], index: 8, kind: output, shape index: {}]
  %s9 = sld [smem:[#allocation0]]
  $region46: #{tpu_custom_call.1} parent=0
    _
  %s11 = ssub.s32 1, %s9
  %s12 = scalar_select 0, %s11, %s9
  %13 = sst [smem:[#allocation2]] %s7
  $region1: #{tpu_custom_call.1} parent=0
    #allocation3 [shape = 'u8[262144]{0}', space=vmem, size = 0x40000, scoped, tag = 'input window, operand 2, single buffered']
    #allocation4 [shape = 's32[1]{0}', space=sflag, size = 0x4, scoped, tag = 'scoped memory for tpu_custom_call.1']
    #allocation5 [shape = 's32[1]{0}', space=sflag, size = 0x4, scoped, tag = 'scoped memory for tpu_custom_call.1']
    #allocation6 [shape = 'u8[4096]{0}', space=vmem, size = 0x1000, scoped, tag = 'output window, operand 0, single buffered']
    %14 = vsyncpa [#allocation4], 0
    %15 = vsyncpa [#allocation5], 0
    // Predicated region
    $region2: #{tpu_custom_call.1} parent=1 // pred_check
      _
    $region3: #{tpu_custom_call.1} parent=1 // pred_check_branch
      %17 = sbr.rel (0) target = $region5
    $region4: #{tpu_custom_call.1} parent=1 // pred_region
      _
    $region5: #{tpu_custom_call.1} parent=1 // pred_fallthru
      _
    // Predicated region
    $region6: #{tpu_custom_call.1} parent=1 // pred_check
      _
    $region7: #{tpu_custom_call.1} parent=1 // pred_check_branch
      %19 = sbr.rel (0) target = $region9
    $region8: #{tpu_custom_call.1} parent=1 // pred_region
      _
    $region9: #{tpu_custom_call.1} parent=1 // pred_fallthru
      _
    // Predicated region
    $region10: #{tpu_custom_call.1} parent=1 // pred_check
      _
    $region11: #{tpu_custom_call.1} parent=1 // pred_check_branch
      %21 = sbr.rel (0) target = $region13
    $region12: #{tpu_custom_call.1} parent=1 // pred_region
      %s23 = ssub.s32 8192, 8192
      %24 = vsyncadd [#allocation4], %s23
      %s25 = sshll.u32 [#allocation3], 4
      %s26 = int_to_ptr.vmem [resolvable:$true] %s25
      %31 = dma.hbm_to_vmem [thread:$0]  %s2, 8192, %s26, [#allocation4], 512, 512, 32
    $region13: #{tpu_custom_call.1} parent=1 // pred_fallthru
      _
    // Predicated region
    $region14: #{tpu_custom_call.1} parent=1 // pred_check
      _
    $region15: #{tpu_custom_call.1} parent=1 // pred_check_branch
      %33 = sbr.rel (0) target = $region17
    $region16: #{tpu_custom_call.1} parent=1 // pred_region
      _
    $region17: #{tpu_custom_call.1} parent=1 // pred_fallthru
      _
    // Predicated region
    $region18: #{tpu_custom_call.1} parent=1 // pred_check
      _
    $region19: #{tpu_custom_call.1} parent=1 // pred_check_branch
      %35 = sbr.rel (0) target = $region21
    $region20: #{tpu_custom_call.1} parent=1 // pred_region
      _
    $region21: #{tpu_custom_call.1} parent=1 // pred_fallthru
      _
    // Predicated region
    $region22: #{tpu_custom_call.1} parent=1 // pred_check
      _
    $region23: #{tpu_custom_call.1} parent=1 // pred_check_branch
      %37 = sbr.rel (0) target = $region25
    $region24: #{tpu_custom_call.1} parent=1 // pred_region
      _
    $region25: #{tpu_custom_call.1} parent=1 // pred_fallthru
      _
    // Predicated region
    $region26: #{tpu_custom_call.1} parent=1 // pred_check
      _
    $region27: #{tpu_custom_call.1} parent=1 // pred_check_branch
      %39 = sbr.rel (0) target = $region29
    $region28: #{tpu_custom_call.1} parent=1 // pred_region
      _
    $region29: #{tpu_custom_call.1} parent=1 // pred_fallthru
      _
    // Predicated region
    $region30: #{tpu_custom_call.1} parent=1 // pred_check
      _
    $region31: #{tpu_custom_call.1} parent=1 // pred_check_branch
      %41 = sbr.rel (0) target = $region33
    $region32: #{tpu_custom_call.1} parent=1 // pred_region
      _
    $region33: #{tpu_custom_call.1} parent=1 // pred_fallthru
      _
    // Predicated region
    $region34: #{tpu_custom_call.1} parent=1 // pred_check
      _
    $region35: #{tpu_custom_call.1} parent=1 // pred_check_branch
      %43 = sbr.rel (0) target = $region37
    $region36: #{tpu_custom_call.1} parent=1 // pred_region
      %44 = dma.done [#allocation4], 8192
    $region37: #{tpu_custom_call.1} parent=1 // pred_fallthru
      _
    %v45 = vld [vmem:[%s0] sm:$0xff]
    %v46 = vld [vmem:[%s0 + $0x8] sm:$0xff]
    %v47 = vld [vmem:[%s0 + $0x10] sm:$0xff]
    %v48 = vld [vmem:[%s0 + $0x18] sm:$0xff]
    %v49 = vld [vmem:[%s0 + $0x20] sm:$0xff]
    %v50 = vld [vmem:[%s0 + $0x28] sm:$0xff]
    %v51 = vld [vmem:[%s0 + $0x30] sm:$0xff]
    %v52 = vld [vmem:[%s0 + $0x38] sm:$0xff]
    %v53 = vld [vmem:[%s1] sm:$0x7f]
    %v54 = vld [vmem:[%s1 + $0x8] sm:$0x7f]
    %v55 = vld [vmem:[%s1 + $0x10] sm:$0x7f]
    %v56 = vld [vmem:[%s1 + $0x18] sm:$0x7f]
    %v57 = vld [vmem:[%s3] sm:$0xf]
    %v59 = vlaneseq
    %v60 = vshrl.u32 %v59, 7
    %v61 = vsub.s32 0, %v60
    %v62 = vrot.slane %v57, %v61
    %v63 = vlaneseq
    %v64 = vshrl.u32 %v63, 7
    %v65 = vsub.s32 1, %v64
    %v66 = vrot.slane %v57, %v65
    %v67 = vlaneseq
    %v68 = vshrl.u32 %v67, 7
    %v69 = vsub.s32 2, %v68
    %v70 = vrot.slane %v57, %v69
    %v71 = vlaneseq
    %v72 = vshrl.u32 %v71, 7
    %v73 = vsub.s32 3, %v72
    %v74 = vrot.slane %v57, %v73
    %vm79 = vcmask 56320
    %v81 = vsel %vm79, %v45, 0
    %v84 = vsel %vm79, %v46, 0
    %v87 = vsel %vm79, %v47, 0
    %v90 = vsel %vm79, %v48, 0
    %v93 = vsel %vm79, %v49, 0
    %v96 = vsel %vm79, %v50, 0
    %v99 = vsel %vm79, %v51, 0
    %v102 = vsel %vm79, %v52, 0
    %vm104 = vcmask 1046528
    %v106 = vsel %vm104, %v53, 0
    %v109 = vsel %vm104, %v54, 0
    %v112 = vsel %vm104, %v55, 0
    %v115 = vsel %vm104, %v56, 0
    %117 = vmatprep.subr.mxu0 0.0
    %118 = vmatpush1.msra.mxu0 0.0
    %119 = vmatprep.subr.mxu0 0.0
    %120 = vmatpush1.msra.mxu0 0.0
    %121 = vmatprep.subr.mxu0 0.0
    %122 = vmatpush1.msra.mxu0 0.0
    %123 = vmatprep.subr.mxu0 0.0
    %124 = vmatpush1.msra.mxu0 0.0
    %125 = vmatprep.subr.mxu0 0.0
    %126 = vmatpush1.msra.mxu0 0.0
    %127 = vmatprep.subr.mxu0 0.0
    %128 = vmatpush1.msra.mxu0 0.0
    %129 = vmatprep.subr.mxu0 0.0
    %130 = vmatpush1.msra.mxu0 0.0
    %131 = vmatprep.subr.mxu0 0.0
    %132 = vmatpush1.msra.mxu0 0.0
    %133 = vmatprep.subr.mxu0 0.0
    %134 = vmatpush1.msra.mxu0 0.0
    %135 = vmatprep.subr.mxu0 0.0
    %136 = vmatpush1.msra.mxu0 0.0
    %137 = vmatprep.subr.mxu0 0.0
    %138 = vmatpush1.msra.mxu0 0.0
    %139 = vmatprep.subr.mxu0 0.0
    %140 = vmatpush1.msra.mxu0 0.0
    %141 = vmatprep.subr.mxu0 0.0
    %142 = vmatpush1.msra.mxu0 0.0
    %143 = vmatprep.subr.mxu0 0.0
    %144 = vmatpush1.msra.mxu0 0.0
    %145 = vmatprep.subr.mxu0 0.0
    %146 = vmatpush1.msra.mxu0 0.0
    %147 = vmatprep.subr.mxu0 %v109
    %148 = vmatpush1.msra.mxu0 %v106
    %149 = vmatprep.subr.mxu0 0.0
    %150 = vmatpush2.msra.mxu0 0.0
    %151 = vmatprep.subr.mxu0 0.0
    %152 = vmatpush2.msra.mxu0 0.0
    %153 = vmatprep.subr.mxu0 0.0
    %154 = vmatpush2.msra.mxu0 0.0
    %155 = vmatprep.subr.mxu0 0.0
    %156 = vmatpush2.msra.mxu0 0.0
    %157 = vmatprep.subr.mxu0 0.0
    %158 = vmatpush2.msra.mxu0 0.0
    %159 = vmatprep.subr.mxu0 0.0
    %160 = vmatpush2.msra.mxu0 0.0
    %161 = vmatprep.subr.mxu0 0.0
    %162 = vmatpush2.msra.mxu0 0.0
    %163 = vmatprep.subr.mxu0 0.0
    %164 = vmatpush2.msra.mxu0 0.0
    %165 = vmatprep.subr.mxu0 0.0
    %166 = vmatpush2.msra.mxu0 0.0
    %167 = vmatprep.subr.mxu0 0.0
    %168 = vmatpush2.msra.mxu0 0.0
    %169 = vmatprep.subr.mxu0 0.0
    %170 = vmatpush2.msra.mxu0 0.0
    %171 = vmatprep.subr.mxu0 0.0
    %172 = vmatpush2.msra.mxu0 0.0
    %173 = vmatprep.subr.mxu0 0.0
    %174 = vmatpush2.msra.mxu0 0.0
    %175 = vmatprep.subr.mxu0 0.0
    %176 = vmatpush2.msra.mxu0 0.0
    %177 = vmatprep.subr.mxu0 0.0
    %178 = vmatpush2.msra.mxu0 0.0
    %179 = vmatprep.subr.mxu0 0.0
    %180 = vmatpush2.msra.mxu0 0.0
    %181 = vmatprep.mubr.f32.mxu0 0.0
    %182 = vmatmul.mubr.f32.gmra.mxu0 %v81
    %v183 = vpop.f32.mrf.mxu0
    %v184 = vadd.f32 %v62, %v183
    %v185 = vpop.f32.mrf.mxu0
    %v186 = vadd.f32 %v66, %v185
    %187 = vmatprep.mubr.f32.mxu0 0.0
    %188 = vmatmul.mubr.f32.gmra.mxu0 %v84
    %v189 = vpop.f32.mrf.mxu0
    %v190 = vadd.f32 %v62, %v189
    %v191 = vpop.f32.mrf.mxu0
    %v192 = vadd.f32 %v66, %v191
    %193 = vmatprep.mubr.f32.mxu0 0.0
    %194 = vmatmul.mubr.f32.gmra.mxu0 %v87
    %v195 = vpop.f32.mrf.mxu0
    %v196 = vadd.f32 %v62, %v195
    %v197 = vpop.f32.mrf.mxu0
    %v198 = vadd.f32 %v66, %v197
    %199 = vmatprep.mubr.f32.mxu0 0.0
    %200 = vmatmul.mubr.f32.gmra.mxu0 %v90
    %v201 = vpop.f32.mrf.mxu0
    %v202 = vadd.f32 %v62, %v201
    %v203 = vpop.f32.mrf.mxu0
    %v204 = vadd.f32 %v66, %v203
    %205 = vmatprep.mubr.f32.mxu0 0.0
    %206 = vmatmul.mubr.f32.gmra.mxu0 %v93
    %v207 = vpop.f32.mrf.mxu0
    %v208 = vadd.f32 %v62, %v207
    %v209 = vpop.f32.mrf.mxu0
    %v210 = vadd.f32 %v66, %v209
    %211 = vmatprep.mubr.f32.mxu0 0.0
    %212 = vmatmul.mubr.f32.gmra.mxu0 %v96
    %v213 = vpop.f32.mrf.mxu0
    %v214 = vadd.f32 %v62, %v213
    %v215 = vpop.f32.mrf.mxu0
    %v216 = vadd.f32 %v66, %v215
    %217 = vmatprep.mubr.f32.mxu0 0.0
    %218 = vmatmul.mubr.f32.gmra.mxu0 %v99
    %v219 = vpop.f32.mrf.mxu0
    %v220 = vadd.f32 %v62, %v219
    %v221 = vpop.f32.mrf.mxu0
    %v222 = vadd.f32 %v66, %v221
    %223 = vmatprep.mubr.f32.mxu0 0.0
    %224 = vmatmul.mubr.f32.gmra.mxu0 %v102
    %v225 = vpop.f32.mrf.mxu0
    %v226 = vadd.f32 %v62, %v225
    %v227 = vpop.f32.mrf.mxu0
    %v228 = vadd.f32 %v66, %v227
    %229 = vdwg.mxu0
    %230 = vmatprep.subr.mxu0 0.0
    %231 = vmatpush1.msra.mxu0 0.0
    %232 = vmatprep.subr.mxu0 0.0
    %233 = vmatpush1.msra.mxu0 0.0
    %234 = vmatprep.subr.mxu0 0.0
    %235 = vmatpush1.msra.mxu0 0.0
    %236 = vmatprep.subr.mxu0 0.0
    %237 = vmatpush1.msra.mxu0 0.0
    %238 = vmatprep.subr.mxu0 0.0
    %239 = vmatpush1.msra.mxu0 0.0
    %240 = vmatprep.subr.mxu0 0.0
    %241 = vmatpush1.msra.mxu0 0.0
    %242 = vmatprep.subr.mxu0 0.0
    %243 = vmatpush1.msra.mxu0 0.0
    %244 = vmatprep.subr.mxu0 0.0
    %245 = vmatpush1.msra.mxu0 0.0
    %246 = vmatprep.subr.mxu0 0.0
    %247 = vmatpush1.msra.mxu0 0.0
    %248 = vmatprep.subr.mxu0 0.0
    %249 = vmatpush1.msra.mxu0 0.0
    %250 = vmatprep.subr.mxu0 0.0
    %251 = vmatpush1.msra.mxu0 0.0
    %252 = vmatprep.subr.mxu0 0.0
    %253 = vmatpush1.msra.mxu0 0.0
    %254 = vmatprep.subr.mxu0 0.0
    %255 = vmatpush1.msra.mxu0 0.0
    %256 = vmatprep.subr.mxu0 0.0
    %257 = vmatpush1.msra.mxu0 0.0
    %258 = vmatprep.subr.mxu0 0.0
    %259 = vmatpush1.msra.mxu0 0.0
    %260 = vmatprep.subr.mxu0 %v115
    %261 = vmatpush1.msra.mxu0 %v112
    %262 = vmatprep.subr.mxu0 0.0
    %263 = vmatpush2.msra.mxu0 0.0
    %264 = vmatprep.subr.mxu0 0.0
    %265 = vmatpush2.msra.mxu0 0.0
    %266 = vmatprep.subr.mxu0 0.0
    %267 = vmatpush2.msra.mxu0 0.0
    %268 = vmatprep.subr.mxu0 0.0
    %269 = vmatpush2.msra.mxu0 0.0
    %270 = vmatprep.subr.mxu0 0.0
    %271 = vmatpush2.msra.mxu0 0.0
    %272 = vmatprep.subr.mxu0 0.0
    %273 = vmatpush2.msra.mxu0 0.0
    %274 = vmatprep.subr.mxu0 0.0
    %275 = vmatpush2.msra.mxu0 0.0
    %276 = vmatprep.subr.mxu0 0.0
    %277 = vmatpush2.msra.mxu0 0.0
    %278 = vmatprep.subr.mxu0 0.0
    %279 = vmatpush2.msra.mxu0 0.0
    %280 = vmatprep.subr.mxu0 0.0
    %281 = vmatpush2.msra.mxu0 0.0
    %282 = vmatprep.subr.mxu0 0.0
    %283 = vmatpush2.msra.mxu0 0.0
    %284 = vmatprep.subr.mxu0 0.0
    %285 = vmatpush2.msra.mxu0 0.0
    %286 = vmatprep.subr.mxu0 0.0
    %287 = vmatpush2.msra.mxu0 0.0
    %288 = vmatprep.subr.mxu0 0.0
    %289 = vmatpush2.msra.mxu0 0.0
    %290 = vmatprep.subr.mxu0 0.0
    %291 = vmatpush2.msra.mxu0 0.0
    %292 = vmatprep.subr.mxu0 0.0
    %293 = vmatpush2.msra.mxu0 0.0
    %294 = vmatprep.mubr.f32.mxu0 0.0
    %295 = vmatmul.mubr.f32.gmra.mxu0 %v81
    %v296 = vpop.f32.mrf.mxu0
    %v297 = vadd.f32 %v70, %v296
    %v298 = vpop.f32.mrf.mxu0
    %v299 = vadd.f32 %v74, %v298
    %300 = vmatprep.mubr.f32.mxu0 0.0
    %301 = vmatmul.mubr.f32.gmra.mxu0 %v84
    %v302 = vpop.f32.mrf.mxu0
    %v303 = vadd.f32 %v70, %v302
    %v304 = vpop.f32.mrf.mxu0
    %v305 = vadd.f32 %v74, %v304
    %306 = vmatprep.mubr.f32.mxu0 0.0
    %307 = vmatmul.mubr.f32.gmra.mxu0 %v87
    %v308 = vpop.f32.mrf.mxu0
    %v309 = vadd.f32 %v70, %v308
    %v310 = vpop.f32.mrf.mxu0
    %v311 = vadd.f32 %v74, %v310
    %312 = vmatprep.mubr.f32.mxu0 0.0
    %313 = vmatmul.mubr.f32.gmra.mxu0 %v90
    %v314 = vpop.f32.mrf.mxu0
    %v315 = vadd.f32 %v70, %v314
    %v316 = vpop.f32.mrf.mxu0
    %v317 = vadd.f32 %v74, %v316
    %318 = vmatprep.mubr.f32.mxu0 0.0
    %319 = vmatmul.mubr.f32.gmra.mxu0 %v93
    %v320 = vpop.f32.mrf.mxu0
    %v321 = vadd.f32 %v70, %v320
    %v322 = vpop.f32.mrf.mxu0
    %v323 = vadd.f32 %v74, %v322
    %324 = vmatprep.mubr.f32.mxu0 0.0
    %325 = vmatmul.mubr.f32.gmra.mxu0 %v96
    %v326 = vpop.f32.mrf.mxu0
    %v327 = vadd.f32 %v70, %v326
    %v328 = vpop.f32.mrf.mxu0
    %v329 = vadd.f32 %v74, %v328
    %330 = vmatprep.mubr.f32.mxu0 0.0
    %331 = vmatmul.mubr.f32.gmra.mxu0 %v99
    %v332 = vpop.f32.mrf.mxu0
    %v333 = vadd.f32 %v70, %v332
    %v334 = vpop.f32.mrf.mxu0
    %v335 = vadd.f32 %v74, %v334
    %336 = vmatprep.mubr.f32.mxu0 0.0
    %337 = vmatmul.mubr.f32.gmra.mxu0 %v102
    %v338 = vpop.f32.mrf.mxu0
    %v339 = vadd.f32 %v70, %v338
    %v340 = vpop.f32.mrf.mxu0
    %v341 = vadd.f32 %v74, %v340
    %342 = vdwg.mxu0
    %v343 = vld [vmem:[#allocation3] sm:$0xff]
    %v344 = vld [vmem:[#allocation3 + $0x8] sm:$0xff]
    %v345 = vld [vmem:[#allocation3 + $0x10] sm:$0xff]
    %v346 = vld [vmem:[#allocation3 + $0x18] sm:$0xff]
    %v347 = vld [vmem:[#allocation3 + $0x20] sm:$0xff]
    %v348 = vld [vmem:[#allocation3 + $0x28] sm:$0xff]
    %v349 = vld [vmem:[#allocation3 + $0x30] sm:$0xff]
    %v350 = vld [vmem:[#allocation3 + $0x38] sm:$0xff]
    %v351 = vld [vmem:[#allocation3 + $0x40] sm:$0xff]
    %v352 = vld [vmem:[#allocation3 + $0x48] sm:$0xff]
    %v353 = vld [vmem:[#allocation3 + $0x50] sm:$0xff]
    %v354 = vld [vmem:[#allocation3 + $0x58] sm:$0xff]
    %v355 = vld [vmem:[#allocation3 + $0x60] sm:$0xff]
    %v356 = vld [vmem:[#allocation3 + $0x68] sm:$0xff]
    %v357 = vld [vmem:[#allocation3 + $0x70] sm:$0xff]
    %v358 = vld [vmem:[#allocation3 + $0x78] sm:$0xff]
    %v359 = vld [vmem:[#allocation3 + $0x80] sm:$0xff]
    %v360 = vld [vmem:[#allocation3 + $0x88] sm:$0xff]
    %v361 = vld [vmem:[#allocation3 + $0x90] sm:$0xff]
    %v362 = vld [vmem:[#allocation3 + $0x98] sm:$0xff]
    %v363 = vld [vmem:[#allocation3 + $0xa0] sm:$0xff]
    %v364 = vld [vmem:[#allocation3 + $0xa8] sm:$0xff]
    %v365 = vld [vmem:[#allocation3 + $0xb0] sm:$0xff]
    %v366 = vld [vmem:[#allocation3 + $0xb8] sm:$0xff]
    %v367 = vld [vmem:[#allocation3 + $0xc0] sm:$0xff]
    %v368 = vld [vmem:[#allocation3 + $0xc8] sm:$0xff]
    %v369 = vld [vmem:[#allocation3 + $0xd0] sm:$0xff]
    %v370 = vld [vmem:[#allocation3 + $0xd8] sm:$0xff]
    %v371 = vld [vmem:[#allocation3 + $0xe0] sm:$0xff]
    %v372 = vld [vmem:[#allocation3 + $0xe8] sm:$0xff]
    %v373 = vld [vmem:[#allocation3 + $0xf0] sm:$0xff]
    %v374 = vld [vmem:[#allocation3 + $0xf8] sm:$0xff]
    %v375 = vld [vmem:[#allocation3 + $0x100] sm:$0xff]
    %v376 = vld [vmem:[#allocation3 + $0x108] sm:$0xff]
    %v377 = vld [vmem:[#allocation3 + $0x110] sm:$0xff]
    %v378 = vld [vmem:[#allocation3 + $0x118] sm:$0xff]
    %v379 = vld [vmem:[#allocation3 + $0x120] sm:$0xff]
    %v380 = vld [vmem:[#allocation3 + $0x128] sm:$0xff]
    %v381 = vld [vmem:[#allocation3 + $0x130] sm:$0xff]
    %v382 = vld [vmem:[#allocation3 + $0x138] sm:$0xff]
    %v383 = vld [vmem:[#allocation3 + $0x140] sm:$0xff]
    %v384 = vld [vmem:[#allocation3 + $0x148] sm:$0xff]
    %v385 = vld [vmem:[#allocation3 + $0x150] sm:$0xff]
    %v386 = vld [vmem:[#allocation3 + $0x158] sm:$0xff]
    %v387 = vld [vmem:[#allocation3 + $0x160] sm:$0xff]
    %v388 = vld [vmem:[#allocation3 + $0x168] sm:$0xff]
    %v389 = vld [vmem:[#allocation3 + $0x170] sm:$0xff]
    %v390 = vld [vmem:[#allocation3 + $0x178] sm:$0xff]
    %v391 = vld [vmem:[#allocation3 + $0x180] sm:$0xff]
    %v392 = vld [vmem:[#allocation3 + $0x188] sm:$0xff]
    %v393 = vld [vmem:[#allocation3 + $0x190] sm:$0xff]
    %v394 = vld [vmem:[#allocation3 + $0x198] sm:$0xff]
    %v395 = vld [vmem:[#allocation3 + $0x1a0] sm:$0xff]
    %v396 = vld [vmem:[#allocation3 + $0x1a8] sm:$0xff]
    %v397 = vld [vmem:[#allocation3 + $0x1b0] sm:$0xff]
    %v398 = vld [vmem:[#allocation3 + $0x1b8] sm:$0xff]
    %v399 = vld [vmem:[#allocation3 + $0x1c0] sm:$0xff]
    %v400 = vld [vmem:[#allocation3 + $0x1c8] sm:$0xff]
    %v401 = vld [vmem:[#allocation3 + $0x1d0] sm:$0xff]
    %v402 = vld [vmem:[#allocation3 + $0x1d8] sm:$0xff]
    %v403 = vld [vmem:[#allocation3 + $0x1e0] sm:$0xff]
    %v404 = vld [vmem:[#allocation3 + $0x1e8] sm:$0xff]
    %v405 = vld [vmem:[#allocation3 + $0x1f0] sm:$0xff]
    %v406 = vld [vmem:[#allocation3 + $0x1f8] sm:$0xff]
    %407 = vmatprep.subr.mxu0 %v404
    %408 = vmatpush1.msra.mxu0 %v403
    %409 = vmatprep.subr.mxu0 %v400
    %410 = vmatpush1.msra.mxu0 %v399
    %411 = vmatprep.subr.mxu0 %v396
    %412 = vmatpush1.msra.mxu0 %v395
    %413 = vmatprep.subr.mxu0 %v392
    %414 = vmatpush1.msra.mxu0 %v391
    %415 = vmatprep.subr.mxu0 %v388
    %416 = vmatpush1.msra.mxu0 %v387
    %417 = vmatprep.subr.mxu0 %v384
    %418 = vmatpush1.msra.mxu0 %v383
    %419 = vmatprep.subr.mxu0 %v380
    %420 = vmatpush1.msra.mxu0 %v379
    %421 = vmatprep.subr.mxu0 %v376
    %422 = vmatpush1.msra.mxu0 %v375
    %423 = vmatprep.subr.mxu0 %v372
    %424 = vmatpush1.msra.mxu0 %v371
    %425 = vmatprep.subr.mxu0 %v368
    %426 = vmatpush1.msra.mxu0 %v367
    %427 = vmatprep.subr.mxu0 %v364
    %428 = vmatpush1.msra.mxu0 %v363
    %429 = vmatprep.subr.mxu0 %v360
    %430 = vmatpush1.msra.mxu0 %v359
    %431 = vmatprep.subr.mxu0 %v356
    %432 = vmatpush1.msra.mxu0 %v355
    %433 = vmatprep.subr.mxu0 %v352
    %434 = vmatpush1.msra.mxu0 %v351
    %435 = vmatprep.subr.mxu0 %v348
    %436 = vmatpush1.msra.mxu0 %v347
    %437 = vmatprep.subr.mxu0 %v344
    %438 = vmatpush1.msra.mxu0 %v343
    %439 = vmatprep.subr.mxu0 0.0
    %440 = vmatpush2.msra.mxu0 0.0
    %441 = vmatprep.subr.mxu0 0.0
    %442 = vmatpush2.msra.mxu0 0.0
    %443 = vmatprep.subr.mxu0 0.0
    %444 = vmatpush2.msra.mxu0 0.0
    %445 = vmatprep.subr.mxu0 0.0
    %446 = vmatpush2.msra.mxu0 0.0
    %447 = vmatprep.subr.mxu0 0.0
    %448 = vmatpush2.msra.mxu0 0.0
    %449 = vmatprep.subr.mxu0 0.0
    %450 = vmatpush2.msra.mxu0 0.0
    %451 = vmatprep.subr.mxu0 0.0
    %452 = vmatpush2.msra.mxu0 0.0
    %453 = vmatprep.subr.mxu0 0.0
    %454 = vmatpush2.msra.mxu0 0.0
    %455 = vmatprep.subr.mxu0 0.0
    %456 = vmatpush2.msra.mxu0 0.0
    %457 = vmatprep.subr.mxu0 0.0
    %458 = vmatpush2.msra.mxu0 0.0
    %459 = vmatprep.subr.mxu0 0.0
    %460 = vmatpush2.msra.mxu0 0.0
    %461 = vmatprep.subr.mxu0 0.0
    %462 = vmatpush2.msra.mxu0 0.0
    %463 = vmatprep.subr.mxu0 0.0
    %464 = vmatpush2.msra.mxu0 0.0
    %465 = vmatprep.subr.mxu0 0.0
    %466 = vmatpush2.msra.mxu0 0.0
    %467 = vmatprep.subr.mxu0 0.0
    %468 = vmatpush2.msra.mxu0 0.0
    %469 = vmatprep.subr.mxu0 0.0
    %470 = vmatpush2.msra.mxu0 0.0
    %471 = vmatprep.mubr.f32.mxu0 0.0
    %472 = vmatmul.mubr.f32.gmra.mxu0 0.0
    %v473 = vpop.f32.mrf.mxu0
    %v474 = vadd.f32 0.0, %v473
    %v475 = vpop.f32.mrf.mxu0
    %v476 = vadd.f32 0.0, %v475
    %477 = vdwg.mxu0
    %478 = vmatprep.subr.mxu0 %v406
    %479 = vmatpush1.msra.mxu0 %v405
    %480 = vmatprep.subr.mxu0 %v402
    %481 = vmatpush1.msra.mxu0 %v401
    %482 = vmatprep.subr.mxu0 %v398
    %483 = vmatpush1.msra.mxu0 %v397
    %484 = vmatprep.subr.mxu0 %v394
    %485 = vmatpush1.msra.mxu0 %v393
    %486 = vmatprep.subr.mxu0 %v390
    %487 = vmatpush1.msra.mxu0 %v389
    %488 = vmatprep.subr.mxu0 %v386
    %489 = vmatpush1.msra.mxu0 %v385
    %490 = vmatprep.subr.mxu0 %v382
    %491 = vmatpush1.msra.mxu0 %v381
    %492 = vmatprep.subr.mxu0 %v378
    %493 = vmatpush1.msra.mxu0 %v377
    %494 = vmatprep.subr.mxu0 %v374
    %495 = vmatpush1.msra.mxu0 %v373
    %496 = vmatprep.subr.mxu0 %v370
    %497 = vmatpush1.msra.mxu0 %v369
    %498 = vmatprep.subr.mxu0 %v366
    %499 = vmatpush1.msra.mxu0 %v365
    %500 = vmatprep.subr.mxu0 %v362
    %501 = vmatpush1.msra.mxu0 %v361
    %502 = vmatprep.subr.mxu0 %v358
    %503 = vmatpush1.msra.mxu0 %v357
    %504 = vmatprep.subr.mxu0 %v354
    %505 = vmatpush1.msra.mxu0 %v353
    %506 = vmatprep.subr.mxu0 %v350
    %507 = vmatpush1.msra.mxu0 %v349
    %508 = vmatprep.subr.mxu0 %v346
    %509 = vmatpush1.msra.mxu0 %v345
    %510 = vmatprep.subr.mxu0 0.0
    %511 = vmatpush2.msra.mxu0 0.0
    %512 = vmatprep.subr.mxu0 0.0
    %513 = vmatpush2.msra.mxu0 0.0
    %514 = vmatprep.subr.mxu0 0.0
    %515 = vmatpush2.msra.mxu0 0.0
    %516 = vmatprep.subr.mxu0 0.0
    %517 = vmatpush2.msra.mxu0 0.0
    %518 = vmatprep.subr.mxu0 0.0
    %519 = vmatpush2.msra.mxu0 0.0
    %520 = vmatprep.subr.mxu0 0.0
    %521 = vmatpush2.msra.mxu0 0.0
    %522 = vmatprep.subr.mxu0 0.0
    %523 = vmatpush2.msra.mxu0 0.0
    %524 = vmatprep.subr.mxu0 0.0
    %525 = vmatpush2.msra.mxu0 0.0
    %526 = vmatprep.subr.mxu0 0.0
    %527 = vmatpush2.msra.mxu0 0.0
    %528 = vmatprep.subr.mxu0 0.0
    %529 = vmatpush2.msra.mxu0 0.0
    %530 = vmatprep.subr.mxu0 0.0
    %531 = vmatpush2.msra.mxu0 0.0
    %532 = vmatprep.subr.mxu0 0.0
    %533 = vmatpush2.msra.mxu0 0.0
    %534 = vmatprep.subr.mxu0 0.0
    %535 = vmatpush2.msra.mxu0 0.0
    %536 = vmatprep.subr.mxu0 0.0
    %537 = vmatpush2.msra.mxu0 0.0
    %538 = vmatprep.subr.mxu0 0.0
    %539 = vmatpush2.msra.mxu0 0.0
    %540 = vmatprep.subr.mxu0 0.0
    %541 = vmatpush2.msra.mxu0 0.0
    %542 = vmatprep.mubr.f32.mxu0 0.0
    %543 = vmatmul.mubr.f32.gmra.mxu0 0.0
    %v544 = vpop.f32.mrf.mxu0
    %v545 = vadd.f32 0.0, %v544
    %v546 = vpop.f32.mrf.mxu0
    %v547 = vadd.f32 0.0, %v546
    %548 = vdwg.mxu0
    %v549 = vadd.f32 %v184, %v474
    %v550 = vadd.f32 %v186, %v476
    %v551 = vadd.f32 %v297, %v545
    %v552 = vadd.f32 %v299, %v547
    %v553 = vxor.u32 %v549, 2147483648
    %v554 = vxor.u32 %v550, 2147483648
    %v555 = vxor.u32 %v551, 2147483648
    %v556 = vmul.f32 %v553, 1.442695
    %v557 = vpow.pop %v556
    %v558 = vmul.f32 %v554, 1.442695
    %v559 = vpow.pop %v558
    %v560 = vmul.f32 %v555, 1.442695
    %v561 = vpow.pop %v560
    %v562 = vadd.f32 %v557, 1.0
    %v563 = vadd.f32 %v559, 1.0
    %v564 = vadd.f32 %v561, 1.0
    %v565 = vrcp.pop %v562
    %v566 = vmul.f32 1.0, %v565
    %v567 = vrcp.pop %v563
    %v568 = vmul.f32 1.0, %v567
    %v569 = vrcp.pop %v564
    %v570 = vmul.f32 1.0, %v569
    %v571 = vtanh.pop %v552
    %v572 = vmul.f32 %v568, 0.0
    %v573 = vmul.f32 %v566, %v571
    %v574 = vadd.f32 %v572, %v573
    %v575 = vtanh.pop %v574
    %v576 = vmul.f32 %v570, %v575
    %577 = vmatprep.subr.mxu0 %v404
    %578 = vmatpush1.msra.mxu0 %v403
    %579 = vmatprep.subr.mxu0 %v400
    %580 = vmatpush1.msra.mxu0 %v399
    %581 = vmatprep.subr.mxu0 %v396
    %582 = vmatpush1.msra.mxu0 %v395
    %583 = vmatprep.subr.mxu0 %v392
    %584 = vmatpush1.msra.mxu0 %v391
    %585 = vmatprep.subr.mxu0 %v388
    %586 = vmatpush1.msra.mxu0 %v387
    %587 = vmatprep.subr.mxu0 %v384
    %588 = vmatpush1.msra.mxu0 %v383
    %589 = vmatprep.subr.mxu0 %v380
    %590 = vmatpush1.msra.mxu0 %v379
    %591 = vmatprep.subr.mxu0 %v376
    %592 = vmatpush1.msra.mxu0 %v375
    %593 = vmatprep.subr.mxu0 %v372
    %594 = vmatpush1.msra.mxu0 %v371
    %595 = vmatprep.subr.mxu0 %v368
    %596 = vmatpush1.msra.mxu0 %v367
    %597 = vmatprep.subr.mxu0 %v364
    %598 = vmatpush1.msra.mxu0 %v363
    %599 = vmatprep.subr.mxu0 %v360
    %600 = vmatpush1.msra.mxu0 %v359
    %601 = vmatprep.subr.mxu0 %v356
    %602 = vmatpush1.msra.mxu0 %v355
    %603 = vmatprep.subr.mxu0 %v352
    %604 = vmatpush1.msra.mxu0 %v351
    %605 = vmatprep.subr.mxu0 %v348
    %606 = vmatpush1.msra.mxu0 %v347
    %607 = vmatprep.subr.mxu0 %v344
    %608 = vmatpush1.msra.mxu0 %v343
    %609 = vmatprep.subr.mxu0 0.0
    %610 = vmatpush2.msra.mxu0 0.0
    %611 = vmatprep.subr.mxu0 0.0
    %612 = vmatpush2.msra.mxu0 0.0
    %613 = vmatprep.subr.mxu0 0.0
    %614 = vmatpush2.msra.mxu0 0.0
    %615 = vmatprep.subr.mxu0 0.0
    %616 = vmatpush2.msra.mxu0 0.0
    %617 = vmatprep.subr.mxu0 0.0
    %618 = vmatpush2.msra.mxu0 0.0
    %619 = vmatprep.subr.mxu0 0.0
    %620 = vmatpush2.msra.mxu0 0.0
    %621 = vmatprep.subr.mxu0 0.0
    %622 = vmatpush2.msra.mxu0 0.0
    %623 = vmatprep.subr.mxu0 0.0
    %624 = vmatpush2.msra.mxu0 0.0
    %625 = vmatprep.subr.mxu0 0.0
    %626 = vmatpush2.msra.mxu0 0.0
    %627 = vmatprep.subr.mxu0 0.0
    %628 = vmatpush2.msra.mxu0 0.0
    %629 = vmatprep.subr.mxu0 0.0
    %630 = vmatpush2.msra.mxu0 0.0
    %631 = vmatprep.subr.mxu0 0.0
    %632 = vmatpush2.msra.mxu0 0.0
    %633 = vmatprep.subr.mxu0 0.0
    %634 = vmatpush2.msra.mxu0 0.0
    %635 = vmatprep.subr.mxu0 0.0
    %636 = vmatpush2.msra.mxu0 0.0
    %637 = vmatprep.subr.mxu0 0.0
    %638 = vmatpush2.msra.mxu0 0.0
    %639 = vmatprep.subr.mxu0 0.0
    %640 = vmatpush2.msra.mxu0 0.0
    %641 = vmatprep.mubr.f32.mxu0 0.0
    %642 = vmatmul.mubr.f32.gmra.mxu0 %v576
    %v643 = vpop.f32.mrf.mxu0
    %v644 = vadd.f32 0.0, %v643
    %v645 = vpop.f32.mrf.mxu0
    %v646 = vadd.f32 0.0, %v645
    %647 = vdwg.mxu0
    %648 = vmatprep.subr.mxu0 %v406
    %649 = vmatpush1.msra.mxu0 %v405
    %650 = vmatprep.subr.mxu0 %v402
    %651 = vmatpush1.msra.mxu0 %v401
    %652 = vmatprep.subr.mxu0 %v398
    %653 = vmatpush1.msra.mxu0 %v397
    %654 = vmatprep.subr.mxu0 %v394
    %655 = vmatpush1.msra.mxu0 %v393
    %656 = vmatprep.subr.mxu0 %v390
    %657 = vmatpush1.msra.mxu0 %v389
    %658 = vmatprep.subr.mxu0 %v386
    %659 = vmatpush1.msra.mxu0 %v385
    %660 = vmatprep.subr.mxu0 %v382
    %661 = vmatpush1.msra.mxu0 %v381
    %662 = vmatprep.subr.mxu0 %v378
    %663 = vmatpush1.msra.mxu0 %v377
    %664 = vmatprep.subr.mxu0 %v374
    %665 = vmatpush1.msra.mxu0 %v373
    %666 = vmatprep.subr.mxu0 %v370
    %667 = vmatpush1.msra.mxu0 %v369
    %668 = vmatprep.subr.mxu0 %v366
    %669 = vmatpush1.msra.mxu0 %v365
    %670 = vmatprep.subr.mxu0 %v362
    %671 = vmatpush1.msra.mxu0 %v361
    %672 = vmatprep.subr.mxu0 %v358
    %673 = vmatpush1.msra.mxu0 %v357
    %674 = vmatprep.subr.mxu0 %v354
    %675 = vmatpush1.msra.mxu0 %v353
    %676 = vmatprep.subr.mxu0 %v350
    %677 = vmatpush1.msra.mxu0 %v349
    %678 = vmatprep.subr.mxu0 %v346
    %679 = vmatpush1.msra.mxu0 %v345
    %680 = vmatprep.subr.mxu0 0.0
    %681 = vmatpush2.msra.mxu0 0.0
    %682 = vmatprep.subr.mxu0 0.0
    %683 = vmatpush2.msra.mxu0 0.0
    %684 = vmatprep.subr.mxu0 0.0
    %685 = vmatpush2.msra.mxu0 0.0
    %686 = vmatprep.subr.mxu0 0.0
    %687 = vmatpush2.msra.mxu0 0.0
    %688 = vmatprep.subr.mxu0 0.0
    %689 = vmatpush2.msra.mxu0 0.0
    %690 = vmatprep.subr.mxu0 0.0
    %691 = vmatpush2.msra.mxu0 0.0
    %692 = vmatprep.subr.mxu0 0.0
    %693 = vmatpush2.msra.mxu0 0.0
    %694 = vmatprep.subr.mxu0 0.0
    %695 = vmatpush2.msra.mxu0 0.0
    %696 = vmatprep.subr.mxu0 0.0
    %697 = vmatpush2.msra.mxu0 0.0
    %698 = vmatprep.subr.mxu0 0.0
    %699 = vmatpush2.msra.mxu0 0.0
    %700 = vmatprep.subr.mxu0 0.0
    %701 = vmatpush2.msra.mxu0 0.0
    %702 = vmatprep.subr.mxu0 0.0
    %703 = vmatpush2.msra.mxu0 0.0
    %704 = vmatprep.subr.mxu0 0.0
    %705 = vmatpush2.msra.mxu0 0.0
    %706 = vmatprep.subr.mxu0 0.0
    %707 = vmatpush2.msra.mxu0 0.0
    %708 = vmatprep.subr.mxu0 0.0
    %709 = vmatpush2.msra.mxu0 0.0
    %710 = vmatprep.subr.mxu0 0.0
    %711 = vmatpush2.msra.mxu0 0.0
    %712 = vmatprep.mubr.f32.mxu0 0.0
    %713 = vmatmul.mubr.f32.gmra.mxu0 %v576
    %v714 = vpop.f32.mrf.mxu0
    %v715 = vadd.f32 0.0, %v714
    %v716 = vpop.f32.mrf.mxu0
    %v717 = vadd.f32 0.0, %v716
    %718 = vdwg.mxu0
    %v719 = vadd.f32 %v190, %v644
    %v720 = vadd.f32 %v192, %v646
    %v721 = vadd.f32 %v303, %v715
    %v722 = vadd.f32 %v305, %v717
    %v723 = vxor.u32 %v719, 2147483648
    %v724 = vxor.u32 %v720, 2147483648
    %v725 = vxor.u32 %v721, 2147483648
    %v726 = vmul.f32 %v723, 1.442695
    %v727 = vpow.pop %v726
    %v728 = vmul.f32 %v724, 1.442695
    %v729 = vpow.pop %v728
    %v730 = vmul.f32 %v725, 1.442695
    %v731 = vpow.pop %v730
    %v732 = vadd.f32 %v727, 1.0
    %v733 = vadd.f32 %v729, 1.0
    %v734 = vadd.f32 %v731, 1.0
    %v735 = vrcp.pop %v732
    %v736 = vmul.f32 1.0, %v735
    %v737 = vrcp.pop %v733
    %v738 = vmul.f32 1.0, %v737
    %v739 = vrcp.pop %v734
    %v740 = vmul.f32 1.0, %v739
    %v741 = vtanh.pop %v722
    %v742 = vmul.f32 %v738, %v574
    %v743 = vmul.f32 %v736, %v741
    %v744 = vadd.f32 %v742, %v743
    %v745 = vtanh.pop %v744
    %v746 = vmul.f32 %v740, %v745
    %747 = vmatprep.subr.mxu0 %v404
    %748 = vmatpush1.msra.mxu0 %v403
    %749 = vmatprep.subr.mxu0 %v400
    %750 = vmatpush1.msra.mxu0 %v399
    %751 = vmatprep.subr.mxu0 %v396
    %752 = vmatpush1.msra.mxu0 %v395
    %753 = vmatprep.subr.mxu0 %v392
    %754 = vmatpush1.msra.mxu0 %v391
    %755 = vmatprep.subr.mxu0 %v388
    %756 = vmatpush1.msra.mxu0 %v387
    %757 = vmatprep.subr.mxu0 %v384
    %758 = vmatpush1.msra.mxu0 %v383
    %759 = vmatprep.subr.mxu0 %v380
    %760 = vmatpush1.msra.mxu0 %v379
    %761 = vmatprep.subr.mxu0 %v376
    %762 = vmatpush1.msra.mxu0 %v375
    %763 = vmatprep.subr.mxu0 %v372
    %764 = vmatpush1.msra.mxu0 %v371
    %765 = vmatprep.subr.mxu0 %v368
    %766 = vmatpush1.msra.mxu0 %v367
    %767 = vmatprep.subr.mxu0 %v364
    %768 = vmatpush1.msra.mxu0 %v363
    %769 = vmatprep.subr.mxu0 %v360
    %770 = vmatpush1.msra.mxu0 %v359
    %771 = vmatprep.subr.mxu0 %v356
    %772 = vmatpush1.msra.mxu0 %v355
    %773 = vmatprep.subr.mxu0 %v352
    %774 = vmatpush1.msra.mxu0 %v351
    %775 = vmatprep.subr.mxu0 %v348
    %776 = vmatpush1.msra.mxu0 %v347
    %777 = vmatprep.subr.mxu0 %v344
    %778 = vmatpush1.msra.mxu0 %v343
    %779 = vmatprep.subr.mxu0 0.0
    %780 = vmatpush2.msra.mxu0 0.0
    %781 = vmatprep.subr.mxu0 0.0
    %782 = vmatpush2.msra.mxu0 0.0
    %783 = vmatprep.subr.mxu0 0.0
    %784 = vmatpush2.msra.mxu0 0.0
    %785 = vmatprep.subr.mxu0 0.0
    %786 = vmatpush2.msra.mxu0 0.0
    %787 = vmatprep.subr.mxu0 0.0
    %788 = vmatpush2.msra.mxu0 0.0
    %789 = vmatprep.subr.mxu0 0.0
    %790 = vmatpush2.msra.mxu0 0.0
    %791 = vmatprep.subr.mxu0 0.0
    %792 = vmatpush2.msra.mxu0 0.0
    %793 = vmatprep.subr.mxu0 0.0
    %794 = vmatpush2.msra.mxu0 0.0
    %795 = vmatprep.subr.mxu0 0.0
    %796 = vmatpush2.msra.mxu0 0.0
    %797 = vmatprep.subr.mxu0 0.0
    %798 = vmatpush2.msra.mxu0 0.0
    %799 = vmatprep.subr.mxu0 0.0
    %800 = vmatpush2.msra.mxu0 0.0
    %801 = vmatprep.subr.mxu0 0.0
    %802 = vmatpush2.msra.mxu0 0.0
    %803 = vmatprep.subr.mxu0 0.0
    %804 = vmatpush2.msra.mxu0 0.0
    %805 = vmatprep.subr.mxu0 0.0
    %806 = vmatpush2.msra.mxu0 0.0
    %807 = vmatprep.subr.mxu0 0.0
    %808 = vmatpush2.msra.mxu0 0.0
    %809 = vmatprep.subr.mxu0 0.0
    %810 = vmatpush2.msra.mxu0 0.0
    %811 = vmatprep.mubr.f32.mxu0 0.0
    %812 = vmatmul.mubr.f32.gmra.mxu0 %v746
    %v813 = vpop.f32.mrf.mxu0
    %v814 = vadd.f32 0.0, %v813
    %v815 = vpop.f32.mrf.mxu0
    %v816 = vadd.f32 0.0, %v815
    %817 = vdwg.mxu0
    %818 = vmatprep.subr.mxu0 %v406
    %819 = vmatpush1.msra.mxu0 %v405
    %820 = vmatprep.subr.mxu0 %v402
    %821 = vmatpush1.msra.mxu0 %v401
    %822 = vmatprep.subr.mxu0 %v398
    %823 = vmatpush1.msra.mxu0 %v397
    %824 = vmatprep.subr.mxu0 %v394
    %825 = vmatpush1.msra.mxu0 %v393
    %826 = vmatprep.subr.mxu0 %v390
    %827 = vmatpush1.msra.mxu0 %v389
    %828 = vmatprep.subr.mxu0 %v386
    %829 = vmatpush1.msra.mxu0 %v385
    %830 = vmatprep.subr.mxu0 %v382
    %831 = vmatpush1.msra.mxu0 %v381
    %832 = vmatprep.subr.mxu0 %v378
    %833 = vmatpush1.msra.mxu0 %v377
    %834 = vmatprep.subr.mxu0 %v374
    %835 = vmatpush1.msra.mxu0 %v373
    %836 = vmatprep.subr.mxu0 %v370
    %837 = vmatpush1.msra.mxu0 %v369
    %838 = vmatprep.subr.mxu0 %v366
    %839 = vmatpush1.msra.mxu0 %v365
    %840 = vmatprep.subr.mxu0 %v362
    %841 = vmatpush1.msra.mxu0 %v361
    %842 = vmatprep.subr.mxu0 %v358
    %843 = vmatpush1.msra.mxu0 %v357
    %844 = vmatprep.subr.mxu0 %v354
    %845 = vmatpush1.msra.mxu0 %v353
    %846 = vmatprep.subr.mxu0 %v350
    %847 = vmatpush1.msra.mxu0 %v349
    %848 = vmatprep.subr.mxu0 %v346
    %849 = vmatpush1.msra.mxu0 %v345
    %850 = vmatprep.subr.mxu0 0.0
    %851 = vmatpush2.msra.mxu0 0.0
    %852 = vmatprep.subr.mxu0 0.0
    %853 = vmatpush2.msra.mxu0 0.0
    %854 = vmatprep.subr.mxu0 0.0
    %855 = vmatpush2.msra.mxu0 0.0
    %856 = vmatprep.subr.mxu0 0.0
    %857 = vmatpush2.msra.mxu0 0.0
    %858 = vmatprep.subr.mxu0 0.0
    %859 = vmatpush2.msra.mxu0 0.0
    %860 = vmatprep.subr.mxu0 0.0
    %861 = vmatpush2.msra.mxu0 0.0
    %862 = vmatprep.subr.mxu0 0.0
    %863 = vmatpush2.msra.mxu0 0.0
    %864 = vmatprep.subr.mxu0 0.0
    %865 = vmatpush2.msra.mxu0 0.0
    %866 = vmatprep.subr.mxu0 0.0
    %867 = vmatpush2.msra.mxu0 0.0
    %868 = vmatprep.subr.mxu0 0.0
    %869 = vmatpush2.msra.mxu0 0.0
    %870 = vmatprep.subr.mxu0 0.0
    %871 = vmatpush2.msra.mxu0 0.0
    %872 = vmatprep.subr.mxu0 0.0
    %873 = vmatpush2.msra.mxu0 0.0
    %874 = vmatprep.subr.mxu0 0.0
    %875 = vmatpush2.msra.mxu0 0.0
    %876 = vmatprep.subr.mxu0 0.0
    %877 = vmatpush2.msra.mxu0 0.0
    %878 = vmatprep.subr.mxu0 0.0
    %879 = vmatpush2.msra.mxu0 0.0
    %880 = vmatprep.subr.mxu0 0.0
    %881 = vmatpush2.msra.mxu0 0.0
    %882 = vmatprep.mubr.f32.mxu0 0.0
    %883 = vmatmul.mubr.f32.gmra.mxu0 %v746
    %v884 = vpop.f32.mrf.mxu0
    %v885 = vadd.f32 0.0, %v884
    %v886 = vpop.f32.mrf.mxu0
    %v887 = vadd.f32 0.0, %v886
    %888 = vdwg.mxu0
    %v889 = vadd.f32 %v196, %v814
    %v890 = vadd.f32 %v198, %v816
    %v891 = vadd.f32 %v309, %v885
    %v892 = vadd.f32 %v311, %v887
    %v893 = vxor.u32 %v889, 2147483648
    %v894 = vxor.u32 %v890, 2147483648
    %v895 = vxor.u32 %v891, 2147483648
    %v896 = vmul.f32 %v893, 1.442695
    %v897 = vpow.pop %v896
    %v898 = vmul.f32 %v894, 1.442695
    %v899 = vpow.pop %v898
    %v900 = vmul.f32 %v895, 1.442695
    %v901 = vpow.pop %v900
    %v902 = vadd.f32 %v897, 1.0
    %v903 = vadd.f32 %v899, 1.0
    %v904 = vadd.f32 %v901, 1.0
    %v905 = vrcp.pop %v902
    %v906 = vmul.f32 1.0, %v905
    %v907 = vrcp.pop %v903
    %v908 = vmul.f32 1.0, %v907
    %v909 = vrcp.pop %v904
    %v910 = vmul.f32 1.0, %v909
    %v911 = vtanh.pop %v892
    %v912 = vmul.f32 %v908, %v744
    %v913 = vmul.f32 %v906, %v911
    %v914 = vadd.f32 %v912, %v913
    %v915 = vtanh.pop %v914
    %v916 = vmul.f32 %v910, %v915
    %917 = vmatprep.subr.mxu0 %v404
    %918 = vmatpush1.msra.mxu0 %v403
    %919 = vmatprep.subr.mxu0 %v400
    %920 = vmatpush1.msra.mxu0 %v399
    %921 = vmatprep.subr.mxu0 %v396
    %922 = vmatpush1.msra.mxu0 %v395
    %923 = vmatprep.subr.mxu0 %v392
    %924 = vmatpush1.msra.mxu0 %v391
    %925 = vmatprep.subr.mxu0 %v388
    %926 = vmatpush1.msra.mxu0 %v387
    %927 = vmatprep.subr.mxu0 %v384
    %928 = vmatpush1.msra.mxu0 %v383
    %929 = vmatprep.subr.mxu0 %v380
    %930 = vmatpush1.msra.mxu0 %v379
    %931 = vmatprep.subr.mxu0 %v376
    %932 = vmatpush1.msra.mxu0 %v375
    %933 = vmatprep.subr.mxu0 %v372
    %934 = vmatpush1.msra.mxu0 %v371
    %935 = vmatprep.subr.mxu0 %v368
    %936 = vmatpush1.msra.mxu0 %v367
    %937 = vmatprep.subr.mxu0 %v364
    %938 = vmatpush1.msra.mxu0 %v363
    %939 = vmatprep.subr.mxu0 %v360
    %940 = vmatpush1.msra.mxu0 %v359
    %941 = vmatprep.subr.mxu0 %v356
    %942 = vmatpush1.msra.mxu0 %v355
    %943 = vmatprep.subr.mxu0 %v352
    %944 = vmatpush1.msra.mxu0 %v351
    %945 = vmatprep.subr.mxu0 %v348
    %946 = vmatpush1.msra.mxu0 %v347
    %947 = vmatprep.subr.mxu0 %v344
    %948 = vmatpush1.msra.mxu0 %v343
    %949 = vmatprep.subr.mxu0 0.0
    %950 = vmatpush2.msra.mxu0 0.0
    %951 = vmatprep.subr.mxu0 0.0
    %952 = vmatpush2.msra.mxu0 0.0
    %953 = vmatprep.subr.mxu0 0.0
    %954 = vmatpush2.msra.mxu0 0.0
    %955 = vmatprep.subr.mxu0 0.0
    %956 = vmatpush2.msra.mxu0 0.0
    %957 = vmatprep.subr.mxu0 0.0
    %958 = vmatpush2.msra.mxu0 0.0
    %959 = vmatprep.subr.mxu0 0.0
    %960 = vmatpush2.msra.mxu0 0.0
    %961 = vmatprep.subr.mxu0 0.0
    %962 = vmatpush2.msra.mxu0 0.0
    %963 = vmatprep.subr.mxu0 0.0
    %964 = vmatpush2.msra.mxu0 0.0
    %965 = vmatprep.subr.mxu0 0.0
    %966 = vmatpush2.msra.mxu0 0.0
    %967 = vmatprep.subr.mxu0 0.0
    %968 = vmatpush2.msra.mxu0 0.0
    %969 = vmatprep.subr.mxu0 0.0
    %970 = vmatpush2.msra.mxu0 0.0
    %971 = vmatprep.subr.mxu0 0.0
    %972 = vmatpush2.msra.mxu0 0.0
    %973 = vmatprep.subr.mxu0 0.0
    %974 = vmatpush2.msra.mxu0 0.0
    %975 = vmatprep.subr.mxu0 0.0
    %976 = vmatpush2.msra.mxu0 0.0
    %977 = vmatprep.subr.mxu0 0.0
    %978 = vmatpush2.msra.mxu0 0.0
    %979 = vmatprep.subr.mxu0 0.0
    %980 = vmatpush2.msra.mxu0 0.0
    %981 = vmatprep.mubr.f32.mxu0 0.0
    %982 = vmatmul.mubr.f32.gmra.mxu0 %v916
    %v983 = vpop.f32.mrf.mxu0
    %v984 = vadd.f32 0.0, %v983
    %v985 = vpop.f32.mrf.mxu0
    %v986 = vadd.f32 0.0, %v985
    %987 = vdwg.mxu0
    %988 = vmatprep.subr.mxu0 %v406
    %989 = vmatpush1.msra.mxu0 %v405
    %990 = vmatprep.subr.mxu0 %v402
    %991 = vmatpush1.msra.mxu0 %v401
    %992 = vmatprep.subr.mxu0 %v398
    %993 = vmatpush1.msra.mxu0 %v397
    %994 = vmatprep.subr.mxu0 %v394
    %995 = vmatpush1.msra.mxu0 %v393
    %996 = vmatprep.subr.mxu0 %v390
    %997 = vmatpush1.msra.mxu0 %v389
    %998 = vmatprep.subr.mxu0 %v386
    %999 = vmatpush1.msra.mxu0 %v385
    %1000 = vmatprep.subr.mxu0 %v382
    %1001 = vmatpush1.msra.mxu0 %v381
    %1002 = vmatprep.subr.mxu0 %v378
    %1003 = vmatpush1.msra.mxu0 %v377
    %1004 = vmatprep.subr.mxu0 %v374
    %1005 = vmatpush1.msra.mxu0 %v373
    %1006 = vmatprep.subr.mxu0 %v370
    %1007 = vmatpush1.msra.mxu0 %v369
    %1008 = vmatprep.subr.mxu0 %v366
    %1009 = vmatpush1.msra.mxu0 %v365
    %1010 = vmatprep.subr.mxu0 %v362
    %1011 = vmatpush1.msra.mxu0 %v361
    %1012 = vmatprep.subr.mxu0 %v358
    %1013 = vmatpush1.msra.mxu0 %v357
    %1014 = vmatprep.subr.mxu0 %v354
    %1015 = vmatpush1.msra.mxu0 %v353
    %1016 = vmatprep.subr.mxu0 %v350
    %1017 = vmatpush1.msra.mxu0 %v349
    %1018 = vmatprep.subr.mxu0 %v346
    %1019 = vmatpush1.msra.mxu0 %v345
    %1020 = vmatprep.subr.mxu0 0.0
    %1021 = vmatpush2.msra.mxu0 0.0
    %1022 = vmatprep.subr.mxu0 0.0
    %1023 = vmatpush2.msra.mxu0 0.0
    %1024 = vmatprep.subr.mxu0 0.0
    %1025 = vmatpush2.msra.mxu0 0.0
    %1026 = vmatprep.subr.mxu0 0.0
    %1027 = vmatpush2.msra.mxu0 0.0
    %1028 = vmatprep.subr.mxu0 0.0
    %1029 = vmatpush2.msra.mxu0 0.0
    %1030 = vmatprep.subr.mxu0 0.0
    %1031 = vmatpush2.msra.mxu0 0.0
    %1032 = vmatprep.subr.mxu0 0.0
    %1033 = vmatpush2.msra.mxu0 0.0
    %1034 = vmatprep.subr.mxu0 0.0
    %1035 = vmatpush2.msra.mxu0 0.0
    %1036 = vmatprep.subr.mxu0 0.0
    %1037 = vmatpush2.msra.mxu0 0.0
    %1038 = vmatprep.subr.mxu0 0.0
    %1039 = vmatpush2.msra.mxu0 0.0
    %1040 = vmatprep.subr.mxu0 0.0
    %1041 = vmatpush2.msra.mxu0 0.0
    %1042 = vmatprep.subr.mxu0 0.0
    %1043 = vmatpush2.msra.mxu0 0.0
    %1044 = vmatprep.subr.mxu0 0.0
    %1045 = vmatpush2.msra.mxu0 0.0
    %1046 = vmatprep.subr.mxu0 0.0
    %1047 = vmatpush2.msra.mxu0 0.0
    %1048 = vmatprep.subr.mxu0 0.0
    %1049 = vmatpush2.msra.mxu0 0.0
    %1050 = vmatprep.subr.mxu0 0.0
    %1051 = vmatpush2.msra.mxu0 0.0
    %1052 = vmatprep.mubr.f32.mxu0 0.0
    %1053 = vmatmul.mubr.f32.gmra.mxu0 %v916
    %v1054 = vpop.f32.mrf.mxu0
    %v1055 = vadd.f32 0.0, %v1054
    %v1056 = vpop.f32.mrf.mxu0
    %v1057 = vadd.f32 0.0, %v1056
    %1058 = vdwg.mxu0
    %v1059 = vadd.f32 %v202, %v984
    %v1060 = vadd.f32 %v204, %v986
    %v1061 = vadd.f32 %v315, %v1055
    %v1062 = vadd.f32 %v317, %v1057
    %v1063 = vxor.u32 %v1059, 2147483648
    %v1064 = vxor.u32 %v1060, 2147483648
    %v1065 = vxor.u32 %v1061, 2147483648
    %v1066 = vmul.f32 %v1063, 1.442695
    %v1067 = vpow.pop %v1066
    %v1068 = vmul.f32 %v1064, 1.442695
    %v1069 = vpow.pop %v1068
    %v1070 = vmul.f32 %v1065, 1.442695
    %v1071 = vpow.pop %v1070
    %v1072 = vadd.f32 %v1067, 1.0
    %v1073 = vadd.f32 %v1069, 1.0
    %v1074 = vadd.f32 %v1071, 1.0
    %v1075 = vrcp.pop %v1072
    %v1076 = vmul.f32 1.0, %v1075
    %v1077 = vrcp.pop %v1073
    %v1078 = vmul.f32 1.0, %v1077
    %v1079 = vrcp.pop %v1074
    %v1080 = vmul.f32 1.0, %v1079
    %v1081 = vtanh.pop %v1062
    %v1082 = vmul.f32 %v1078, %v914
    %v1083 = vmul.f32 %v1076, %v1081
    %v1084 = vadd.f32 %v1082, %v1083
    %v1085 = vtanh.pop %v1084
    %v1086 = vmul.f32 %v1080, %v1085
    %1087 = vmatprep.subr.mxu0 %v404
    %1088 = vmatpush1.msra.mxu0 %v403
    %1089 = vmatprep.subr.mxu0 %v400
    %1090 = vmatpush1.msra.mxu0 %v399
    %1091 = vmatprep.subr.mxu0 %v396
    %1092 = vmatpush1.msra.mxu0 %v395
    %1093 = vmatprep.subr.mxu0 %v392
    %1094 = vmatpush1.msra.mxu0 %v391
    %1095 = vmatprep.subr.mxu0 %v388
    %1096 = vmatpush1.msra.mxu0 %v387
    %1097 = vmatprep.subr.mxu0 %v384
    %1098 = vmatpush1.msra.mxu0 %v383
    %1099 = vmatprep.subr.mxu0 %v380
    %1100 = vmatpush1.msra.mxu0 %v379
    %1101 = vmatprep.subr.mxu0 %v376
    %1102 = vmatpush1.msra.mxu0 %v375
    %1103 = vmatprep.subr.mxu0 %v372
    %1104 = vmatpush1.msra.mxu0 %v371
    %1105 = vmatprep.subr.mxu0 %v368
    %1106 = vmatpush1.msra.mxu0 %v367
    %1107 = vmatprep.subr.mxu0 %v364
    %1108 = vmatpush1.msra.mxu0 %v363
    %1109 = vmatprep.subr.mxu0 %v360
    %1110 = vmatpush1.msra.mxu0 %v359
    %1111 = vmatprep.subr.mxu0 %v356
    %1112 = vmatpush1.msra.mxu0 %v355
    %1113 = vmatprep.subr.mxu0 %v352
    %1114 = vmatpush1.msra.mxu0 %v351
    %1115 = vmatprep.subr.mxu0 %v348
    %1116 = vmatpush1.msra.mxu0 %v347
    %1117 = vmatprep.subr.mxu0 %v344
    %1118 = vmatpush1.msra.mxu0 %v343
    %1119 = vmatprep.subr.mxu0 0.0
    %1120 = vmatpush2.msra.mxu0 0.0
    %1121 = vmatprep.subr.mxu0 0.0
    %1122 = vmatpush2.msra.mxu0 0.0
    %1123 = vmatprep.subr.mxu0 0.0
    %1124 = vmatpush2.msra.mxu0 0.0
    %1125 = vmatprep.subr.mxu0 0.0
    %1126 = vmatpush2.msra.mxu0 0.0
    %1127 = vmatprep.subr.mxu0 0.0
    %1128 = vmatpush2.msra.mxu0 0.0
    %1129 = vmatprep.subr.mxu0 0.0
    %1130 = vmatpush2.msra.mxu0 0.0
    %1131 = vmatprep.subr.mxu0 0.0
    %1132 = vmatpush2.msra.mxu0 0.0
    %1133 = vmatprep.subr.mxu0 0.0
    %1134 = vmatpush2.msra.mxu0 0.0
    %1135 = vmatprep.subr.mxu0 0.0
    %1136 = vmatpush2.msra.mxu0 0.0
    %1137 = vmatprep.subr.mxu0 0.0
    %1138 = vmatpush2.msra.mxu0 0.0
    %1139 = vmatprep.subr.mxu0 0.0
    %1140 = vmatpush2.msra.mxu0 0.0
    %1141 = vmatprep.subr.mxu0 0.0
    %1142 = vmatpush2.msra.mxu0 0.0
    %1143 = vmatprep.subr.mxu0 0.0
    %1144 = vmatpush2.msra.mxu0 0.0
    %1145 = vmatprep.subr.mxu0 0.0
    %1146 = vmatpush2.msra.mxu0 0.0
    %1147 = vmatprep.subr.mxu0 0.0
    %1148 = vmatpush2.msra.mxu0 0.0
    %1149 = vmatprep.subr.mxu0 0.0
    %1150 = vmatpush2.msra.mxu0 0.0
    %1151 = vmatprep.mubr.f32.mxu0 0.0
    %1152 = vmatmul.mubr.f32.gmra.mxu0 %v1086
    %v1153 = vpop.f32.mrf.mxu0
    %v1154 = vadd.f32 0.0, %v1153
    %v1155 = vpop.f32.mrf.mxu0
    %v1156 = vadd.f32 0.0, %v1155
    %1157 = vdwg.mxu0
    %1158 = vmatprep.subr.mxu0 %v406
    %1159 = vmatpush1.msra.mxu0 %v405
    %1160 = vmatprep.subr.mxu0 %v402
    %1161 = vmatpush1.msra.mxu0 %v401
    %1162 = vmatprep.subr.mxu0 %v398
    %1163 = vmatpush1.msra.mxu0 %v397
    %1164 = vmatprep.subr.mxu0 %v394
    %1165 = vmatpush1.msra.mxu0 %v393
    %1166 = vmatprep.subr.mxu0 %v390
    %1167 = vmatpush1.msra.mxu0 %v389
    %1168 = vmatprep.subr.mxu0 %v386
    %1169 = vmatpush1.msra.mxu0 %v385
    %1170 = vmatprep.subr.mxu0 %v382
    %1171 = vmatpush1.msra.mxu0 %v381
    %1172 = vmatprep.subr.mxu0 %v378
    %1173 = vmatpush1.msra.mxu0 %v377
    %1174 = vmatprep.subr.mxu0 %v374
    %1175 = vmatpush1.msra.mxu0 %v373
    %1176 = vmatprep.subr.mxu0 %v370
    %1177 = vmatpush1.msra.mxu0 %v369
    %1178 = vmatprep.subr.mxu0 %v366
    %1179 = vmatpush1.msra.mxu0 %v365
    %1180 = vmatprep.subr.mxu0 %v362
    %1181 = vmatpush1.msra.mxu0 %v361
    %1182 = vmatprep.subr.mxu0 %v358
    %1183 = vmatpush1.msra.mxu0 %v357
    %1184 = vmatprep.subr.mxu0 %v354
    %1185 = vmatpush1.msra.mxu0 %v353
    %1186 = vmatprep.subr.mxu0 %v350
    %1187 = vmatpush1.msra.mxu0 %v349
    %1188 = vmatprep.subr.mxu0 %v346
    %1189 = vmatpush1.msra.mxu0 %v345
    %1190 = vmatprep.subr.mxu0 0.0
    %1191 = vmatpush2.msra.mxu0 0.0
    %1192 = vmatprep.subr.mxu0 0.0
    %1193 = vmatpush2.msra.mxu0 0.0
    %1194 = vmatprep.subr.mxu0 0.0
    %1195 = vmatpush2.msra.mxu0 0.0
    %1196 = vmatprep.subr.mxu0 0.0
    %1197 = vmatpush2.msra.mxu0 0.0
    %1198 = vmatprep.subr.mxu0 0.0
    %1199 = vmatpush2.msra.mxu0 0.0
    %1200 = vmatprep.subr.mxu0 0.0
    %1201 = vmatpush2.msra.mxu0 0.0
    %1202 = vmatprep.subr.mxu0 0.0
    %1203 = vmatpush2.msra.mxu0 0.0
    %1204 = vmatprep.subr.mxu0 0.0
    %1205 = vmatpush2.msra.mxu0 0.0
    %1206 = vmatprep.subr.mxu0 0.0
    %1207 = vmatpush2.msra.mxu0 0.0
    %1208 = vmatprep.subr.mxu0 0.0
    %1209 = vmatpush2.msra.mxu0 0.0
    %1210 = vmatprep.subr.mxu0 0.0
    %1211 = vmatpush2.msra.mxu0 0.0
    %1212 = vmatprep.subr.mxu0 0.0
    %1213 = vmatpush2.msra.mxu0 0.0
    %1214 = vmatprep.subr.mxu0 0.0
    %1215 = vmatpush2.msra.mxu0 0.0
    %1216 = vmatprep.subr.mxu0 0.0
    %1217 = vmatpush2.msra.mxu0 0.0
    %1218 = vmatprep.subr.mxu0 0.0
    %1219 = vmatpush2.msra.mxu0 0.0
    %1220 = vmatprep.subr.mxu0 0.0
    %1221 = vmatpush2.msra.mxu0 0.0
    %1222 = vmatprep.mubr.f32.mxu0 0.0
    %1223 = vmatmul.mubr.f32.gmra.mxu0 %v1086
    %v1224 = vpop.f32.mrf.mxu0
    %v1225 = vadd.f32 0.0, %v1224
    %v1226 = vpop.f32.mrf.mxu0
    %v1227 = vadd.f32 0.0, %v1226
    %1228 = vdwg.mxu0
    %v1229 = vadd.f32 %v208, %v1154
    %v1230 = vadd.f32 %v210, %v1156
    %v1231 = vadd.f32 %v321, %v1225
    %v1232 = vadd.f32 %v323, %v1227
    %v1233 = vxor.u32 %v1229, 2147483648
    %v1234 = vxor.u32 %v1230, 2147483648
    %v1235 = vxor.u32 %v1231, 2147483648
    %v1236 = vmul.f32 %v1233, 1.442695
    %v1237 = vpow.pop %v1236
    %v1238 = vmul.f32 %v1234, 1.442695
    %v1239 = vpow.pop %v1238
    %v1240 = vmul.f32 %v1235, 1.442695
    %v1241 = vpow.pop %v1240
    %v1242 = vadd.f32 %v1237, 1.0
    %v1243 = vadd.f32 %v1239, 1.0
    %v1244 = vadd.f32 %v1241, 1.0
    %v1245 = vrcp.pop %v1242
    %v1246 = vmul.f32 1.0, %v1245
    %v1247 = vrcp.pop %v1243
    %v1248 = vmul.f32 1.0, %v1247
    %v1249 = vrcp.pop %v1244
    %v1250 = vmul.f32 1.0, %v1249
    %v1251 = vtanh.pop %v1232
    %v1252 = vmul.f32 %v1248, %v1084
    %v1253 = vmul.f32 %v1246, %v1251
    %v1254 = vadd.f32 %v1252, %v1253
    %v1255 = vtanh.pop %v1254
    %v1256 = vmul.f32 %v1250, %v1255
    %1257 = vmatprep.subr.mxu0 %v404
    %1258 = vmatpush1.msra.mxu0 %v403
    %1259 = vmatprep.subr.mxu0 %v400
    %1260 = vmatpush1.msra.mxu0 %v399
    %1261 = vmatprep.subr.mxu0 %v396
    %1262 = vmatpush1.msra.mxu0 %v395
    %1263 = vmatprep.subr.mxu0 %v392
    %1264 = vmatpush1.msra.mxu0 %v391
    %1265 = vmatprep.subr.mxu0 %v388
    %1266 = vmatpush1.msra.mxu0 %v387
    %1267 = vmatprep.subr.mxu0 %v384
    %1268 = vmatpush1.msra.mxu0 %v383
    %1269 = vmatprep.subr.mxu0 %v380
    %1270 = vmatpush1.msra.mxu0 %v379
    %1271 = vmatprep.subr.mxu0 %v376
    %1272 = vmatpush1.msra.mxu0 %v375
    %1273 = vmatprep.subr.mxu0 %v372
    %1274 = vmatpush1.msra.mxu0 %v371
    %1275 = vmatprep.subr.mxu0 %v368
    %1276 = vmatpush1.msra.mxu0 %v367
    %1277 = vmatprep.subr.mxu0 %v364
    %1278 = vmatpush1.msra.mxu0 %v363
    %1279 = vmatprep.subr.mxu0 %v360
    %1280 = vmatpush1.msra.mxu0 %v359
    %1281 = vmatprep.subr.mxu0 %v356
    %1282 = vmatpush1.msra.mxu0 %v355
    %1283 = vmatprep.subr.mxu0 %v352
    %1284 = vmatpush1.msra.mxu0 %v351
    %1285 = vmatprep.subr.mxu0 %v348
    %1286 = vmatpush1.msra.mxu0 %v347
    %1287 = vmatprep.subr.mxu0 %v344
    %1288 = vmatpush1.msra.mxu0 %v343
    %1289 = vmatprep.subr.mxu0 0.0
    %1290 = vmatpush2.msra.mxu0 0.0
    %1291 = vmatprep.subr.mxu0 0.0
    %1292 = vmatpush2.msra.mxu0 0.0
    %1293 = vmatprep.subr.mxu0 0.0
    %1294 = vmatpush2.msra.mxu0 0.0
    %1295 = vmatprep.subr.mxu0 0.0
    %1296 = vmatpush2.msra.mxu0 0.0
    %1297 = vmatprep.subr.mxu0 0.0
    %1298 = vmatpush2.msra.mxu0 0.0
    %1299 = vmatprep.subr.mxu0 0.0
    %1300 = vmatpush2.msra.mxu0 0.0
    %1301 = vmatprep.subr.mxu0 0.0
    %1302 = vmatpush2.msra.mxu0 0.0
    %1303 = vmatprep.subr.mxu0 0.0
    %1304 = vmatpush2.msra.mxu0 0.0
    %1305 = vmatprep.subr.mxu0 0.0
    %1306 = vmatpush2.msra.mxu0 0.0
    %1307 = vmatprep.subr.mxu0 0.0
    %1308 = vmatpush2.msra.mxu0 0.0
    %1309 = vmatprep.subr.mxu0 0.0
    %1310 = vmatpush2.msra.mxu0 0.0
    %1311 = vmatprep.subr.mxu0 0.0
    %1312 = vmatpush2.msra.mxu0 0.0
    %1313 = vmatprep.subr.mxu0 0.0
    %1314 = vmatpush2.msra.mxu0 0.0
    %1315 = vmatprep.subr.mxu0 0.0
    %1316 = vmatpush2.msra.mxu0 0.0
    %1317 = vmatprep.subr.mxu0 0.0
    %1318 = vmatpush2.msra.mxu0 0.0
    %1319 = vmatprep.subr.mxu0 0.0
    %1320 = vmatpush2.msra.mxu0 0.0
    %1321 = vmatprep.mubr.f32.mxu0 0.0
    %1322 = vmatmul.mubr.f32.gmra.mxu0 %v1256
    %v1323 = vpop.f32.mrf.mxu0
    %v1324 = vadd.f32 0.0, %v1323
    %v1325 = vpop.f32.mrf.mxu0
    %v1326 = vadd.f32 0.0, %v1325
    %1327 = vdwg.mxu0
    %1328 = vmatprep.subr.mxu0 %v406
    %1329 = vmatpush1.msra.mxu0 %v405
    %1330 = vmatprep.subr.mxu0 %v402
    %1331 = vmatpush1.msra.mxu0 %v401
    %1332 = vmatprep.subr.mxu0 %v398
    %1333 = vmatpush1.msra.mxu0 %v397
    %1334 = vmatprep.subr.mxu0 %v394
    %1335 = vmatpush1.msra.mxu0 %v393
    %1336 = vmatprep.subr.mxu0 %v390
    %1337 = vmatpush1.msra.mxu0 %v389
    %1338 = vmatprep.subr.mxu0 %v386
    %1339 = vmatpush1.msra.mxu0 %v385
    %1340 = vmatprep.subr.mxu0 %v382
    %1341 = vmatpush1.msra.mxu0 %v381
    %1342 = vmatprep.subr.mxu0 %v378
    %1343 = vmatpush1.msra.mxu0 %v377
    %1344 = vmatprep.subr.mxu0 %v374
    %1345 = vmatpush1.msra.mxu0 %v373
    %1346 = vmatprep.subr.mxu0 %v370
    %1347 = vmatpush1.msra.mxu0 %v369
    %1348 = vmatprep.subr.mxu0 %v366
    %1349 = vmatpush1.msra.mxu0 %v365
    %1350 = vmatprep.subr.mxu0 %v362
    %1351 = vmatpush1.msra.mxu0 %v361
    %1352 = vmatprep.subr.mxu0 %v358
    %1353 = vmatpush1.msra.mxu0 %v357
    %1354 = vmatprep.subr.mxu0 %v354
    %1355 = vmatpush1.msra.mxu0 %v353
    %1356 = vmatprep.subr.mxu0 %v350
    %1357 = vmatpush1.msra.mxu0 %v349
    %1358 = vmatprep.subr.mxu0 %v346
    %1359 = vmatpush1.msra.mxu0 %v345
    %1360 = vmatprep.subr.mxu0 0.0
    %1361 = vmatpush2.msra.mxu0 0.0
    %1362 = vmatprep.subr.mxu0 0.0
    %1363 = vmatpush2.msra.mxu0 0.0
    %1364 = vmatprep.subr.mxu0 0.0
    %1365 = vmatpush2.msra.mxu0 0.0
    %1366 = vmatprep.subr.mxu0 0.0
    %1367 = vmatpush2.msra.mxu0 0.0
    %1368 = vmatprep.subr.mxu0 0.0
    %1369 = vmatpush2.msra.mxu0 0.0
    %1370 = vmatprep.subr.mxu0 0.0
    %1371 = vmatpush2.msra.mxu0 0.0
    %1372 = vmatprep.subr.mxu0 0.0
    %1373 = vmatpush2.msra.mxu0 0.0
    %1374 = vmatprep.subr.mxu0 0.0
    %1375 = vmatpush2.msra.mxu0 0.0
    %1376 = vmatprep.subr.mxu0 0.0
    %1377 = vmatpush2.msra.mxu0 0.0
    %1378 = vmatprep.subr.mxu0 0.0
    %1379 = vmatpush2.msra.mxu0 0.0
    %1380 = vmatprep.subr.mxu0 0.0
    %1381 = vmatpush2.msra.mxu0 0.0
    %1382 = vmatprep.subr.mxu0 0.0
    %1383 = vmatpush2.msra.mxu0 0.0
    %1384 = vmatprep.subr.mxu0 0.0
    %1385 = vmatpush2.msra.mxu0 0.0
    %1386 = vmatprep.subr.mxu0 0.0
    %1387 = vmatpush2.msra.mxu0 0.0
    %1388 = vmatprep.subr.mxu0 0.0
    %1389 = vmatpush2.msra.mxu0 0.0
    %1390 = vmatprep.subr.mxu0 0.0
    %1391 = vmatpush2.msra.mxu0 0.0
    %1392 = vmatprep.mubr.f32.mxu0 0.0
    %1393 = vmatmul.mubr.f32.gmra.mxu0 %v1256
    %v1394 = vpop.f32.mrf.mxu0
    %v1395 = vadd.f32 0.0, %v1394
    %v1396 = vpop.f32.mrf.mxu0
    %v1397 = vadd.f32 0.0, %v1396
    %1398 = vdwg.mxu0
    %v1399 = vadd.f32 %v214, %v1324
    %v1400 = vadd.f32 %v216, %v1326
    %v1401 = vadd.f32 %v327, %v1395
    %v1402 = vadd.f32 %v329, %v1397
    %v1403 = vxor.u32 %v1399, 2147483648
    %v1404 = vxor.u32 %v1400, 2147483648
    %v1405 = vxor.u32 %v1401, 2147483648
    %v1406 = vmul.f32 %v1403, 1.442695
    %v1407 = vpow.pop %v1406
    %v1408 = vmul.f32 %v1404, 1.442695
    %v1409 = vpow.pop %v1408
    %v1410 = vmul.f32 %v1405, 1.442695
    %v1411 = vpow.pop %v1410
    %v1412 = vadd.f32 %v1407, 1.0
    %v1413 = vadd.f32 %v1409, 1.0
    %v1414 = vadd.f32 %v1411, 1.0
    %v1415 = vrcp.pop %v1412
    %v1416 = vmul.f32 1.0, %v1415
    %v1417 = vrcp.pop %v1413
    %v1418 = vmul.f32 1.0, %v1417
    %v1419 = vrcp.pop %v1414
    %v1420 = vmul.f32 1.0, %v1419
    %v1421 = vtanh.pop %v1402
    %v1422 = vmul.f32 %v1418, %v1254
    %v1423 = vmul.f32 %v1416, %v1421
    %v1424 = vadd.f32 %v1422, %v1423
    %v1425 = vtanh.pop %v1424
    %v1426 = vmul.f32 %v1420, %v1425
    %1427 = vmatprep.subr.mxu0 %v404
    %1428 = vmatpush1.msra.mxu0 %v403
    %1429 = vmatprep.subr.mxu0 %v400
    %1430 = vmatpush1.msra.mxu0 %v399
    %1431 = vmatprep.subr.mxu0 %v396
    %1432 = vmatpush1.msra.mxu0 %v395
    %1433 = vmatprep.subr.mxu0 %v392
    %1434 = vmatpush1.msra.mxu0 %v391
    %1435 = vmatprep.subr.mxu0 %v388
    %1436 = vmatpush1.msra.mxu0 %v387
    %1437 = vmatprep.subr.mxu0 %v384
    %1438 = vmatpush1.msra.mxu0 %v383
    %1439 = vmatprep.subr.mxu0 %v380
    %1440 = vmatpush1.msra.mxu0 %v379
    %1441 = vmatprep.subr.mxu0 %v376
    %1442 = vmatpush1.msra.mxu0 %v375
    %1443 = vmatprep.subr.mxu0 %v372
    %1444 = vmatpush1.msra.mxu0 %v371
    %1445 = vmatprep.subr.mxu0 %v368
    %1446 = vmatpush1.msra.mxu0 %v367
    %1447 = vmatprep.subr.mxu0 %v364
    %1448 = vmatpush1.msra.mxu0 %v363
    %1449 = vmatprep.subr.mxu0 %v360
    %1450 = vmatpush1.msra.mxu0 %v359
    %1451 = vmatprep.subr.mxu0 %v356
    %1452 = vmatpush1.msra.mxu0 %v355
    %1453 = vmatprep.subr.mxu0 %v352
    %1454 = vmatpush1.msra.mxu0 %v351
    %1455 = vmatprep.subr.mxu0 %v348
    %1456 = vmatpush1.msra.mxu0 %v347
    %1457 = vmatprep.subr.mxu0 %v344
    %1458 = vmatpush1.msra.mxu0 %v343
    %1459 = vmatprep.subr.mxu0 0.0
    %1460 = vmatpush2.msra.mxu0 0.0
    %1461 = vmatprep.subr.mxu0 0.0
    %1462 = vmatpush2.msra.mxu0 0.0
    %1463 = vmatprep.subr.mxu0 0.0
    %1464 = vmatpush2.msra.mxu0 0.0
    %1465 = vmatprep.subr.mxu0 0.0
    %1466 = vmatpush2.msra.mxu0 0.0
    %1467 = vmatprep.subr.mxu0 0.0
    %1468 = vmatpush2.msra.mxu0 0.0
    %1469 = vmatprep.subr.mxu0 0.0
    %1470 = vmatpush2.msra.mxu0 0.0
    %1471 = vmatprep.subr.mxu0 0.0
    %1472 = vmatpush2.msra.mxu0 0.0
    %1473 = vmatprep.subr.mxu0 0.0
    %1474 = vmatpush2.msra.mxu0 0.0
    %1475 = vmatprep.subr.mxu0 0.0
    %1476 = vmatpush2.msra.mxu0 0.0
    %1477 = vmatprep.subr.mxu0 0.0
    %1478 = vmatpush2.msra.mxu0 0.0
    %1479 = vmatprep.subr.mxu0 0.0
    %1480 = vmatpush2.msra.mxu0 0.0
    %1481 = vmatprep.subr.mxu0 0.0
    %1482 = vmatpush2.msra.mxu0 0.0
    %1483 = vmatprep.subr.mxu0 0.0
    %1484 = vmatpush2.msra.mxu0 0.0
    %1485 = vmatprep.subr.mxu0 0.0
    %1486 = vmatpush2.msra.mxu0 0.0
    %1487 = vmatprep.subr.mxu0 0.0
    %1488 = vmatpush2.msra.mxu0 0.0
    %1489 = vmatprep.subr.mxu0 0.0
    %1490 = vmatpush2.msra.mxu0 0.0
    %1491 = vmatprep.mubr.f32.mxu0 0.0
    %1492 = vmatmul.mubr.f32.gmra.mxu0 %v1426
    %v1493 = vpop.f32.mrf.mxu0
    %v1494 = vadd.f32 0.0, %v1493
    %v1495 = vpop.f32.mrf.mxu0
    %v1496 = vadd.f32 0.0, %v1495
    %1497 = vdwg.mxu0
    %1498 = vmatprep.subr.mxu0 %v406
    %1499 = vmatpush1.msra.mxu0 %v405
    %1500 = vmatprep.subr.mxu0 %v402
    %1501 = vmatpush1.msra.mxu0 %v401
    %1502 = vmatprep.subr.mxu0 %v398
    %1503 = vmatpush1.msra.mxu0 %v397
    %1504 = vmatprep.subr.mxu0 %v394
    %1505 = vmatpush1.msra.mxu0 %v393
    %1506 = vmatprep.subr.mxu0 %v390
    %1507 = vmatpush1.msra.mxu0 %v389
    %1508 = vmatprep.subr.mxu0 %v386
    %1509 = vmatpush1.msra.mxu0 %v385
    %1510 = vmatprep.subr.mxu0 %v382
    %1511 = vmatpush1.msra.mxu0 %v381
    %1512 = vmatprep.subr.mxu0 %v378
    %1513 = vmatpush1.msra.mxu0 %v377
    %1514 = vmatprep.subr.mxu0 %v374
    %1515 = vmatpush1.msra.mxu0 %v373
    %1516 = vmatprep.subr.mxu0 %v370
    %1517 = vmatpush1.msra.mxu0 %v369
    %1518 = vmatprep.subr.mxu0 %v366
    %1519 = vmatpush1.msra.mxu0 %v365
    %1520 = vmatprep.subr.mxu0 %v362
    %1521 = vmatpush1.msra.mxu0 %v361
    %1522 = vmatprep.subr.mxu0 %v358
    %1523 = vmatpush1.msra.mxu0 %v357
    %1524 = vmatprep.subr.mxu0 %v354
    %1525 = vmatpush1.msra.mxu0 %v353
    %1526 = vmatprep.subr.mxu0 %v350
    %1527 = vmatpush1.msra.mxu0 %v349
    %1528 = vmatprep.subr.mxu0 %v346
    %1529 = vmatpush1.msra.mxu0 %v345
    %1530 = vmatprep.subr.mxu0 0.0
    %1531 = vmatpush2.msra.mxu0 0.0
    %1532 = vmatprep.subr.mxu0 0.0
    %1533 = vmatpush2.msra.mxu0 0.0
    %1534 = vmatprep.subr.mxu0 0.0
    %1535 = vmatpush2.msra.mxu0 0.0
    %1536 = vmatprep.subr.mxu0 0.0
    %1537 = vmatpush2.msra.mxu0 0.0
    %1538 = vmatprep.subr.mxu0 0.0
    %1539 = vmatpush2.msra.mxu0 0.0
    %1540 = vmatprep.subr.mxu0 0.0
    %1541 = vmatpush2.msra.mxu0 0.0
    %1542 = vmatprep.subr.mxu0 0.0
    %1543 = vmatpush2.msra.mxu0 0.0
    %1544 = vmatprep.subr.mxu0 0.0
    %1545 = vmatpush2.msra.mxu0 0.0
    %1546 = vmatprep.subr.mxu0 0.0
    %1547 = vmatpush2.msra.mxu0 0.0
    %1548 = vmatprep.subr.mxu0 0.0
    %1549 = vmatpush2.msra.mxu0 0.0
    %1550 = vmatprep.subr.mxu0 0.0
    %1551 = vmatpush2.msra.mxu0 0.0
    %1552 = vmatprep.subr.mxu0 0.0
    %1553 = vmatpush2.msra.mxu0 0.0
    %1554 = vmatprep.subr.mxu0 0.0
    %1555 = vmatpush2.msra.mxu0 0.0
    %1556 = vmatprep.subr.mxu0 0.0
    %1557 = vmatpush2.msra.mxu0 0.0
    %1558 = vmatprep.subr.mxu0 0.0
    %1559 = vmatpush2.msra.mxu0 0.0
    %1560 = vmatprep.subr.mxu0 0.0
    %1561 = vmatpush2.msra.mxu0 0.0
    %1562 = vmatprep.mubr.f32.mxu0 0.0
    %1563 = vmatmul.mubr.f32.gmra.mxu0 %v1426
    %v1564 = vpop.f32.mrf.mxu0
    %v1565 = vadd.f32 0.0, %v1564
    %v1566 = vpop.f32.mrf.mxu0
    %v1567 = vadd.f32 0.0, %v1566
    %1568 = vdwg.mxu0
    %v1569 = vadd.f32 %v220, %v1494
    %v1570 = vadd.f32 %v222, %v1496
    %v1571 = vadd.f32 %v333, %v1565
    %v1572 = vadd.f32 %v335, %v1567
    %v1573 = vxor.u32 %v1569, 2147483648
    %v1574 = vxor.u32 %v1570, 2147483648
    %v1575 = vxor.u32 %v1571, 2147483648
    %v1576 = vmul.f32 %v1573, 1.442695
    %v1577 = vpow.pop %v1576
    %v1578 = vmul.f32 %v1574, 1.442695
    %v1579 = vpow.pop %v1578
    %v1580 = vmul.f32 %v1575, 1.442695
    %v1581 = vpow.pop %v1580
    %v1582 = vadd.f32 %v1577, 1.0
    %v1583 = vadd.f32 %v1579, 1.0
    %v1584 = vadd.f32 %v1581, 1.0
    %v1585 = vrcp.pop %v1582
    %v1586 = vmul.f32 1.0, %v1585
    %v1587 = vrcp.pop %v1583
    %v1588 = vmul.f32 1.0, %v1587
    %v1589 = vrcp.pop %v1584
    %v1590 = vmul.f32 1.0, %v1589
    %v1591 = vtanh.pop %v1572
    %v1592 = vmul.f32 %v1588, %v1424
    %v1593 = vmul.f32 %v1586, %v1591
    %v1594 = vadd.f32 %v1592, %v1593
    %v1595 = vtanh.pop %v1594
    %v1596 = vmul.f32 %v1590, %v1595
    %1597 = vmatprep.subr.mxu0 %v404
    %1598 = vmatpush1.msra.mxu0 %v403
    %1599 = vmatprep.subr.mxu0 %v400
    %1600 = vmatpush1.msra.mxu0 %v399
    %1601 = vmatprep.subr.mxu0 %v396
    %1602 = vmatpush1.msra.mxu0 %v395
    %1603 = vmatprep.subr.mxu0 %v392
    %1604 = vmatpush1.msra.mxu0 %v391
    %1605 = vmatprep.subr.mxu0 %v388
    %1606 = vmatpush1.msra.mxu0 %v387
    %1607 = vmatprep.subr.mxu0 %v384
    %1608 = vmatpush1.msra.mxu0 %v383
    %1609 = vmatprep.subr.mxu0 %v380
    %1610 = vmatpush1.msra.mxu0 %v379
    %1611 = vmatprep.subr.mxu0 %v376
    %1612 = vmatpush1.msra.mxu0 %v375
    %1613 = vmatprep.subr.mxu0 %v372
    %1614 = vmatpush1.msra.mxu0 %v371
    %1615 = vmatprep.subr.mxu0 %v368
    %1616 = vmatpush1.msra.mxu0 %v367
    %1617 = vmatprep.subr.mxu0 %v364
    %1618 = vmatpush1.msra.mxu0 %v363
    %1619 = vmatprep.subr.mxu0 %v360
    %1620 = vmatpush1.msra.mxu0 %v359
    %1621 = vmatprep.subr.mxu0 %v356
    %1622 = vmatpush1.msra.mxu0 %v355
    %1623 = vmatprep.subr.mxu0 %v352
    %1624 = vmatpush1.msra.mxu0 %v351
    %1625 = vmatprep.subr.mxu0 %v348
    %1626 = vmatpush1.msra.mxu0 %v347
    %1627 = vmatprep.subr.mxu0 %v344
    %1628 = vmatpush1.msra.mxu0 %v343
    %1629 = vmatprep.subr.mxu0 0.0
    %1630 = vmatpush2.msra.mxu0 0.0
    %1631 = vmatprep.subr.mxu0 0.0
    %1632 = vmatpush2.msra.mxu0 0.0
    %1633 = vmatprep.subr.mxu0 0.0
    %1634 = vmatpush2.msra.mxu0 0.0
    %1635 = vmatprep.subr.mxu0 0.0
    %1636 = vmatpush2.msra.mxu0 0.0
    %1637 = vmatprep.subr.mxu0 0.0
    %1638 = vmatpush2.msra.mxu0 0.0
    %1639 = vmatprep.subr.mxu0 0.0
    %1640 = vmatpush2.msra.mxu0 0.0
    %1641 = vmatprep.subr.mxu0 0.0
    %1642 = vmatpush2.msra.mxu0 0.0
    %1643 = vmatprep.subr.mxu0 0.0
    %1644 = vmatpush2.msra.mxu0 0.0
    %1645 = vmatprep.subr.mxu0 0.0
    %1646 = vmatpush2.msra.mxu0 0.0
    %1647 = vmatprep.subr.mxu0 0.0
    %1648 = vmatpush2.msra.mxu0 0.0
    %1649 = vmatprep.subr.mxu0 0.0
    %1650 = vmatpush2.msra.mxu0 0.0
    %1651 = vmatprep.subr.mxu0 0.0
    %1652 = vmatpush2.msra.mxu0 0.0
    %1653 = vmatprep.subr.mxu0 0.0
    %1654 = vmatpush2.msra.mxu0 0.0
    %1655 = vmatprep.subr.mxu0 0.0
    %1656 = vmatpush2.msra.mxu0 0.0
    %1657 = vmatprep.subr.mxu0 0.0
    %1658 = vmatpush2.msra.mxu0 0.0
    %1659 = vmatprep.subr.mxu0 0.0
    %1660 = vmatpush2.msra.mxu0 0.0
    %1661 = vmatprep.mubr.f32.mxu0 0.0
    %1662 = vmatmul.mubr.f32.gmra.mxu0 %v1596
    %v1663 = vpop.f32.mrf.mxu0
    %v1664 = vadd.f32 0.0, %v1663
    %v1665 = vpop.f32.mrf.mxu0
    %v1666 = vadd.f32 0.0, %v1665
    %1667 = vdwg.mxu0
    %1668 = vmatprep.subr.mxu0 %v406
    %1669 = vmatpush1.msra.mxu0 %v405
    %1670 = vmatprep.subr.mxu0 %v402
    %1671 = vmatpush1.msra.mxu0 %v401
    %1672 = vmatprep.subr.mxu0 %v398
    %1673 = vmatpush1.msra.mxu0 %v397
    %1674 = vmatprep.subr.mxu0 %v394
    %1675 = vmatpush1.msra.mxu0 %v393
    %1676 = vmatprep.subr.mxu0 %v390
    %1677 = vmatpush1.msra.mxu0 %v389
    %1678 = vmatprep.subr.mxu0 %v386
    %1679 = vmatpush1.msra.mxu0 %v385
    %1680 = vmatprep.subr.mxu0 %v382
    %1681 = vmatpush1.msra.mxu0 %v381
    %1682 = vmatprep.subr.mxu0 %v378
    %1683 = vmatpush1.msra.mxu0 %v377
    %1684 = vmatprep.subr.mxu0 %v374
    %1685 = vmatpush1.msra.mxu0 %v373
    %1686 = vmatprep.subr.mxu0 %v370
    %1687 = vmatpush1.msra.mxu0 %v369
    %1688 = vmatprep.subr.mxu0 %v366
    %1689 = vmatpush1.msra.mxu0 %v365
    %1690 = vmatprep.subr.mxu0 %v362
    %1691 = vmatpush1.msra.mxu0 %v361
    %1692 = vmatprep.subr.mxu0 %v358
    %1693 = vmatpush1.msra.mxu0 %v357
    %1694 = vmatprep.subr.mxu0 %v354
    %1695 = vmatpush1.msra.mxu0 %v353
    %1696 = vmatprep.subr.mxu0 %v350
    %1697 = vmatpush1.msra.mxu0 %v349
    %1698 = vmatprep.subr.mxu0 %v346
    %1699 = vmatpush1.msra.mxu0 %v345
    %1700 = vmatprep.subr.mxu0 0.0
    %1701 = vmatpush2.msra.mxu0 0.0
    %1702 = vmatprep.subr.mxu0 0.0
    %1703 = vmatpush2.msra.mxu0 0.0
    %1704 = vmatprep.subr.mxu0 0.0
    %1705 = vmatpush2.msra.mxu0 0.0
    %1706 = vmatprep.subr.mxu0 0.0
    %1707 = vmatpush2.msra.mxu0 0.0
    %1708 = vmatprep.subr.mxu0 0.0
    %1709 = vmatpush2.msra.mxu0 0.0
    %1710 = vmatprep.subr.mxu0 0.0
    %1711 = vmatpush2.msra.mxu0 0.0
    %1712 = vmatprep.subr.mxu0 0.0
    %1713 = vmatpush2.msra.mxu0 0.0
    %1714 = vmatprep.subr.mxu0 0.0
    %1715 = vmatpush2.msra.mxu0 0.0
    %1716 = vmatprep.subr.mxu0 0.0
    %1717 = vmatpush2.msra.mxu0 0.0
    %1718 = vmatprep.subr.mxu0 0.0
    %1719 = vmatpush2.msra.mxu0 0.0
    %1720 = vmatprep.subr.mxu0 0.0
    %1721 = vmatpush2.msra.mxu0 0.0
    %1722 = vmatprep.subr.mxu0 0.0
    %1723 = vmatpush2.msra.mxu0 0.0
    %1724 = vmatprep.subr.mxu0 0.0
    %1725 = vmatpush2.msra.mxu0 0.0
    %1726 = vmatprep.subr.mxu0 0.0
    %1727 = vmatpush2.msra.mxu0 0.0
    %1728 = vmatprep.subr.mxu0 0.0
    %1729 = vmatpush2.msra.mxu0 0.0
    %1730 = vmatprep.subr.mxu0 0.0
    %1731 = vmatpush2.msra.mxu0 0.0
    %1732 = vmatprep.mubr.f32.mxu0 0.0
    %1733 = vmatmul.mubr.f32.gmra.mxu0 %v1596
    %v1734 = vpop.f32.mrf.mxu0
    %v1735 = vadd.f32 0.0, %v1734
    %v1736 = vpop.f32.mrf.mxu0
    %v1737 = vadd.f32 0.0, %v1736
    %1738 = vdwg.mxu0
    %v1739 = vadd.f32 %v226, %v1664
    %v1740 = vadd.f32 %v228, %v1666
    %v1741 = vadd.f32 %v339, %v1735
    %v1742 = vadd.f32 %v341, %v1737
    %v1743 = vxor.u32 %v1739, 2147483648
    %v1744 = vxor.u32 %v1740, 2147483648
    %v1745 = vxor.u32 %v1741, 2147483648
    %v1746 = vmul.f32 %v1743, 1.442695
    %v1747 = vpow.pop %v1746
    %v1748 = vmul.f32 %v1744, 1.442695
    %v1749 = vpow.pop %v1748
    %v1750 = vmul.f32 %v1745, 1.442695
    %v1751 = vpow.pop %v1750
    %v1752 = vadd.f32 %v1747, 1.0
    %v1753 = vadd.f32 %v1749, 1.0
    %v1754 = vadd.f32 %v1751, 1.0
    %v1755 = vrcp.pop %v1752
    %v1756 = vmul.f32 1.0, %v1755
    %v1757 = vrcp.pop %v1753
    %v1758 = vmul.f32 1.0, %v1757
    %v1759 = vrcp.pop %v1754
    %v1760 = vmul.f32 1.0, %v1759
    %v1761 = vtanh.pop %v1742
    %v1762 = vmul.f32 %v1758, %v1594
    %v1763 = vmul.f32 %v1756, %v1761
    %v1764 = vadd.f32 %v1762, %v1763
    %v1765 = vtanh.pop %v1764
    %v1766 = vmul.f32 %v1760, %v1765
    %v1767 = vlaneseq
    %v1768 = vand.u32 %v1767, 127
    %vm1769 = vcmp.lt.s32.totalorder %v1768, 100
    %1770 = vadd.xlane.f32.xlu0 %v1766
    %v1771 = vpop.xlane.xlu0 %1770
    %v1772 = vrcp.pop 100.0
    %v1773 = vmul.f32 %v1771, %v1772
    %v1774 = vsub.f32 %v1766, %v1773
    %v1775 = vsel %vm1769, %v1774, 0.0
    %v1776 = vmul.f32 %v1775, %v1775
    %1777 = vadd.xlane.f32.xlu0 %v1776
    %v1778 = vpop.xlane.xlu0 %1777
    %v1779 = vmul.f32 %v1778, %v1772
    %v1780 = vadd.f32 %v1779, 1e-05
    %v1781 = vrsqrt.pop %v1780
    %v1782 = vmul.f32 %v1775, %v1781
    %v1783 = vld [vmem:[%s4] sm:$0x1]
    %v1785 = vlaneseq
    %v1786 = vshrl.u32 %v1785, 7
    %v1787 = vsub.s32 0, %v1786
    %v1788 = vrot.slane %v1783, %v1787
    %v1790 = vmul.f32 %v1782, %v1788
    %v1791 = vld [vmem:[%s5] sm:$0x1]
    %v1793 = vlaneseq
    %v1794 = vshrl.u32 %v1793, 7
    %v1795 = vsub.s32 0, %v1794
    %v1796 = vrot.slane %v1791, %v1795
    %v1798 = vadd.f32 %v1790, %v1796
    %v1799 = vld [vmem:[%s6] sm:$0x1]
    %v1801 = vlaneseq
    %v1802 = vshrl.u32 %v1801, 7
    %v1803 = vsub.s32 0, %v1802
    %v1804 = vrot.slane %v1799, %v1803
    %v1806 = vmul.f32 %v1798, %v1804
    %1807 = vadd.xlane.f32.xlu0 %v1806
    %v1808 = vpop.xlane.xlu0 %1807
    %s1809 = sld [smem:[#allocation2]]
    %v1810 = vstv %s1809
    %v1811 = vadd.f32 %v1808, %v1810
    %1812 = vst [vmem:[#allocation6] sm:$0xff] %v1811
    // Predicated region
    $region38: #{tpu_custom_call.1} parent=1 // pred_check
      _
    $region39: #{tpu_custom_call.1} parent=1 // pred_check_branch
      %1814 = sbr.rel (0) target = $region41
    $region40: #{tpu_custom_call.1} parent=1 // pred_region
      %s1816 = ssub.s32 128, 128
      %1817 = vsyncadd [#allocation5], %s1816
      %s1819 = sshll.u32 [#allocation6], 4
      %s1820 = int_to_ptr.vmem [resolvable:$true] %s1819
      %1822 = dma.vmem_to_hbm [thread:$0]  %s1820, 128, %s8, [#allocation5]
    $region41: #{tpu_custom_call.1} parent=1 // pred_fallthru
      _
    // Predicated region
    $region42: #{tpu_custom_call.1} parent=1 // pred_check
      _
    $region43: #{tpu_custom_call.1} parent=1 // pred_check_branch
      %1824 = sbr.rel (0) target = $region45
    $region44: #{tpu_custom_call.1} parent=1 // pred_region
      %1825 = dma.done [#allocation5], 128
    $region45: #{tpu_custom_call.1} parent=1 // pred_fallthru
      _
    %1826 = vsyncpa [#allocation4], 1
    %1827 = vsyncpa [#allocation5], 1

</llo_original>
